<compile_context>
chip_gen: v5e
topology: v5e:2x2
jax: 0.10.0
libtpu: 0.0.40
codegen_flags: <defaults>
</compile_context>

<pallas_src>
import jax
import jax.numpy as jnp
import numpy as np
from jax.experimental import pallas as pl
from jax.experimental.pallas import tpu as pltpu


def _lstm_kernel(gx_ref, wh_ref,        # inputs : (S, B, 4H), (H, 4H)
                 out_ref, c_ref):       # outputs: (S, B, H),  (B, H)
    S, B, _ = gx_ref.shape
    H = wh_ref.shape[0]

    # Hoist the (only) weight read above the time loop.
    wh = wh_ref[...]                    # (H, 4H)

    def step(t, carry):
        h, c = carry
        # Recurrent part only: gates_x[t] already contains x_t @ Wx + b.
        gates = gx_ref[t] + jnp.dot(h, wh,
                                    preferred_element_type=jnp.float32)
        # chunk order matches the torch module: f, i, c, o
        f_g = jax.nn.sigmoid(gates[:, 0 * H:1 * H])
        i_g = jax.nn.sigmoid(gates[:, 1 * H:2 * H])
        c_g = jnp.tanh(gates[:, 2 * H:3 * H])
        o_g = jax.nn.sigmoid(gates[:, 3 * H:4 * H])
        c_t = f_g * c + i_g * c_g
        h_t = o_g * jnp.tanh(c_t)
        # Store into the VMEM-resident output slab; HBM writeback happens
        # once for the whole (S, B, H) block after the kernel finishes.
        out_ref[t] = h_t.astype(out_ref.dtype)
        return (h_t, c_t)

    h0 = jnp.zeros((B, H), jnp.float32)
    c0 = jnp.zeros((B, H), jnp.float32)
    _, c_T = jax.lax.fori_loop(0, S, step, (h0, c0), unroll=True)
    c_ref[...] = c_T.astype(c_ref.dtype)


def lstm_layer_pallas(x, w, b, hidden_size):
    """x: (B, S, D) float32. w: (4H, D+H) (torch Linear weight). b: (4H,).

    Returns (outputs(B,S,H), (h_T(B,H), c_T(B,H))) — same as LSTMLayer.forward.
    """
    B, S, D = x.shape
    H = hidden_size
    assert w.shape == (4 * H, D + H)

    # Split the combined linear into x-part and h-part (math-equivalent to cat).
    wx = jnp.transpose(w[:, :D])        # (D, 4H)
    wh = jnp.transpose(w[:, D:])        # (H, 4H)

    # Hoisted input projection, bias folded in, transposed to time-major in
    # the same einsum (no standalone transpose pass over x).
    gates_x = jnp.einsum('bsd,dk->sbk', x, wx,
                         precision=jax.lax.Precision.HIGHEST) + b
    gates_x = gates_x.astype(jnp.float32)             # (S, B, 4H)

    out_tm, c_T = pl.pallas_call(
        _lstm_kernel,
        out_shape=(
            jax.ShapeDtypeStruct((S, B, H), x.dtype),   # time-major outputs
            jax.ShapeDtypeStruct((B, H), x.dtype),      # final cell state
        ),
        grid=(1,),                                      # single grid step
        in_specs=[
            pl.BlockSpec((S, B, 4 * H), lambda i: (0, 0, 0)),
            pl.BlockSpec((H, 4 * H), lambda i: (0, 0)),
        ],
        out_specs=(
            pl.BlockSpec((S, B, H), lambda i: (0, 0, 0)),
            pl.BlockSpec((B, H), lambda i: (0, 0)),
        ),
        compiler_params=pltpu.CompilerParams(
            dimension_semantics=("arbitrary",)),
    )(gates_x, wh)

    outputs = jnp.transpose(out_tm, (1, 0, 2))          # back to (B, S, H)
    h_T = out_tm[S - 1]                                 # == outputs[:, -1]
    return outputs, (h_T, c_T)


def lstm_layer_ref(x, w, b, hidden_size):
    """Pure-JAX reference mirroring the PyTorch module, for verification."""
    B, S, D = x.shape
    H = hidden_size

    def step(carry, x_t):
        h, c = carry
        combined = jnp.concatenate([x_t, h], axis=1)
        gates = jnp.dot(combined, w.T,
                        precision=jax.lax.Precision.HIGHEST) + b
        f_g, i_g, c_g, o_g = jnp.split(gates, 4, axis=1)
        f_g = jax.nn.sigmoid(f_g)
        i_g = jax.nn.sigmoid(i_g)
        c_g = jnp.tanh(c_g)
        o_g = jax.nn.sigmoid(o_g)
        c_t = f_g * c + i_g * c_g
        h_t = o_g * jnp.tanh(c_t)
        return (h_t, c_t), h_t

    h0 = jnp.zeros((B, H), x.dtype)
    c0 = jnp.zeros((B, H), x.dtype)
    (h_T, c_T), outs = jax.lax.scan(step, (h0, c0), jnp.transpose(x, (1, 0, 2)))
    return jnp.transpose(outs, (1, 0, 2)), (h_T, c_T)


if __name__ == "__main__":
    # Small shapes consistent with the module's forward:
    # batch=8, seq=8, input_size=32, hidden_size=128.
    B, S, D, H = 8, 8, 32, 128

    key = jax.random.PRNGKey(0)
    kx, kw, kb = jax.random.split(key, 3)

    x = jax.random.normal(kx, (B, S, D), dtype=jnp.float32)

    # Deterministic init mimicking nn.Linear(D+H, 4H): U(-1/sqrt(K), 1/sqrt(K)).
    K = D + H
    bound = 1.0 / np.sqrt(K)
    w = jax.random.uniform(kw, (4 * H, K), minval=-bound, maxval=bound,
                           dtype=jnp.float32)
    b = jax.random.uniform(kb, (4 * H,), minval=-bound, maxval=bound,
                           dtype=jnp.float32)

    outputs, (h_T, c_T) = lstm_layer_pallas(x, w, b, H)
    jax.block_until_ready((outputs, h_T, c_T))

    # sanity check against pure-JAX reference
    ref_out, (ref_h, ref_c) = lstm_layer_ref(x, w, b, H)
    np.testing.assert_allclose(np.asarray(outputs), np.asarray(ref_out),
                               rtol=1e-5, atol=1e-5)
    np.testing.assert_allclose(np.asarray(h_T), np.asarray(ref_h),
                               rtol=1e-5, atol=1e-5)
    np.testing.assert_allclose(np.asarray(c_T), np.asarray(ref_c),
                               rtol=1e-5, atol=1e-5)

    print("KERNEL_OK")
</pallas_src>

<mosaic_0001>
module attributes {stable_mosaic.version = 11 : i64} {
  func.func @_lstm_kernel(%arg0: i32, %arg1: memref<8x8x512xf32, #tpu.memory_space<vmem>>, %arg2: memref<128x512xf32, #tpu.memory_space<vmem>>, %arg3: memref<8x8x128xf32, #tpu.memory_space<vmem>>, %arg4: memref<8x128xf32, #tpu.memory_space<vmem>>) attributes {dimension_semantics = [#tpu.dimension_semantics<arbitrary>], iteration_bounds = array<i64: 1>, scalar_prefetch = 0 : i64, scratch_operands = 0 : i64, tpu.core_type = #tpu.core_type<tc>, window_params = [{pipeline_mode = #tpu.pipeline_mode<synchronous>, transform_indices = @transform_0, window_bounds = array<i64: 8, 8, 512>}, {pipeline_mode = #tpu.pipeline_mode<synchronous>, transform_indices = @transform_1, window_bounds = array<i64: 128, 512>}, {pipeline_mode = #tpu.pipeline_mode<synchronous>, transform_indices = @transform_2, window_bounds = array<i64: 8, 8, 128>}, {pipeline_mode = #tpu.pipeline_mode<synchronous>, transform_indices = @transform_3, window_bounds = array<i64: 8, 128>}]} {
    %c0 = arith.constant 0 : index
    %c0_0 = arith.constant 0 : index
    %0 = vector.load %arg2[%c0, %c0_0] : memref<128x512xf32, #tpu.memory_space<vmem>>, vector<128x512xf32>
    %cst = arith.constant 0.000000e+00 : f32
    %1 = vector.broadcast %cst : f32 to vector<8x128xf32>
    %cst_1 = arith.constant 0.000000e+00 : f32
    %2 = vector.broadcast %cst_1 : f32 to vector<8x128xf32>
    %c0_i32 = arith.constant 0 : i32
    %3 = arith.index_cast %c0_i32 : i32 to index
    %c0_2 = arith.constant 0 : index
    %c0_3 = arith.constant 0 : index
    %4 = vector.load %arg1[%3, %c0_2, %c0_3] : memref<8x8x512xf32, #tpu.memory_space<vmem>>, vector<1x8x512xf32>
    %5 = vector.shape_cast %4 : vector<1x8x512xf32> to vector<8x512xf32>
    %cst_4 = arith.constant dense<0.000000e+00> : vector<8x512xf32>
    %6 = tpu.matmul %1, %0, %cst_4 {dimension_numbers = #tpu.dot_dimension_numbers<[1], [0], [0], [1], [0, 0, 1, 1], [], []>} : vector<8x128xf32>, vector<128x512xf32>, vector<8x512xf32> -> vector<8x512xf32>
    %7 = arith.addf %5, %6 : vector<8x512xf32>
    %8 = vector.extract_strided_slice %7 {offsets = [0, 0], sizes = [8, 128], strides = [1, 1]} : vector<8x512xf32> to vector<8x128xf32>
    %9 = arith.negf %8 : vector<8x128xf32>
    %10 = math.exp %9 : vector<8x128xf32>
    %cst_5 = arith.constant 1.000000e+00 : f32
    %11 = vector.broadcast %cst_5 : f32 to vector<8x128xf32>
    %12 = arith.addf %11, %10 : vector<8x128xf32>
    %13 = arith.divf %11, %12 : vector<8x128xf32>
    %14 = vector.extract_strided_slice %7 {offsets = [0, 128], sizes = [8, 128], strides = [1, 1]} : vector<8x512xf32> to vector<8x128xf32>
    %15 = arith.negf %14 : vector<8x128xf32>
    %16 = math.exp %15 : vector<8x128xf32>
    %cst_6 = arith.constant 1.000000e+00 : f32
    %17 = vector.broadcast %cst_6 : f32 to vector<8x128xf32>
    %18 = arith.addf %17, %16 : vector<8x128xf32>
    %19 = arith.divf %17, %18 : vector<8x128xf32>
    %20 = vector.extract_strided_slice %7 {offsets = [0, 256], sizes = [8, 128], strides = [1, 1]} : vector<8x512xf32> to vector<8x128xf32>
    %21 = math.tanh %20 : vector<8x128xf32>
    %22 = vector.extract_strided_slice %7 {offsets = [0, 384], sizes = [8, 128], strides = [1, 1]} : vector<8x512xf32> to vector<8x128xf32>
    %23 = arith.negf %22 : vector<8x128xf32>
    %24 = math.exp %23 : vector<8x128xf32>
    %cst_7 = arith.constant 1.000000e+00 : f32
    %25 = vector.broadcast %cst_7 : f32 to vector<8x128xf32>
    %26 = arith.addf %25, %24 : vector<8x128xf32>
    %27 = arith.divf %25, %26 : vector<8x128xf32>
    %28 = arith.mulf %13, %2 : vector<8x128xf32>
    %29 = arith.mulf %19, %21 : vector<8x128xf32>
    %30 = arith.addf %28, %29 : vector<8x128xf32>
    %31 = math.tanh %30 : vector<8x128xf32>
    %32 = arith.mulf %27, %31 : vector<8x128xf32>
    %33 = arith.index_cast %c0_i32 : i32 to index
    %c0_8 = arith.constant 0 : index
    %c0_9 = arith.constant 0 : index
    %34 = vector.load %arg3[%33, %c0_8, %c0_9] : memref<8x8x128xf32, #tpu.memory_space<vmem>>, vector<1x8x128xf32>
    %35 = vector.shape_cast %34 : vector<1x8x128xf32> to vector<8x128xf32>
    %36 = vector.shape_cast %32 : vector<8x128xf32> to vector<1x8x128xf32>
    tpu.vector_store %arg3[%33, %c0_8, %c0_9], %36 {strides = array<i32>} : memref<8x8x128xf32, #tpu.memory_space<vmem>>, vector<1x8x128xf32>,
    %c1_i32 = arith.constant 1 : i32
    %37 = arith.index_cast %c1_i32 : i32 to index
    %c0_10 = arith.constant 0 : index
    %c0_11 = arith.constant 0 : index
    %38 = vector.load %arg1[%37, %c0_10, %c0_11] : memref<8x8x512xf32, #tpu.memory_space<vmem>>, vector<1x8x512xf32>
    %39 = vector.shape_cast %38 : vector<1x8x512xf32> to vector<8x512xf32>
    %cst_12 = arith.constant dense<0.000000e+00> : vector<8x512xf32>
    %40 = tpu.matmul %32, %0, %cst_12 {dimension_numbers = #tpu.dot_dimension_numbers<[1], [0], [0], [1], [0, 0, 1, 1], [], []>} : vector<8x128xf32>, vector<128x512xf32>, vector<8x512xf32> -> vector<8x512xf32>
    %41 = arith.addf %39, %40 : vector<8x512xf32>
    %42 = vector.extract_strided_slice %41 {offsets = [0, 0], sizes = [8, 128], strides = [1, 1]} : vector<8x512xf32> to vector<8x128xf32>
    %43 = arith.negf %42 : vector<8x128xf32>
    %44 = math.exp %43 : vector<8x128xf32>
    %cst_13 = arith.constant 1.000000e+00 : f32
    %45 = vector.broadcast %cst_13 : f32 to vector<8x128xf32>
    %46 = arith.addf %45, %44 : vector<8x128xf32>
    %47 = arith.divf %45, %46 : vector<8x128xf32>
    %48 = vector.extract_strided_slice %41 {offsets = [0, 128], sizes = [8, 128], strides = [1, 1]} : vector<8x512xf32> to vector<8x128xf32>
    %49 = arith.negf %48 : vector<8x128xf32>
    %50 = math.exp %49 : vector<8x128xf32>
    %cst_14 = arith.constant 1.000000e+00 : f32
    %51 = vector.broadcast %cst_14 : f32 to vector<8x128xf32>
    %52 = arith.addf %51, %50 : vector<8x128xf32>
    %53 = arith.divf %51, %52 : vector<8x128xf32>
    %54 = vector.extract_strided_slice %41 {offsets = [0, 256], sizes = [8, 128], strides = [1, 1]} : vector<8x512xf32> to vector<8x128xf32>
    %55 = math.tanh %54 : vector<8x128xf32>
    %56 = vector.extract_strided_slice %41 {offsets = [0, 384], sizes = [8, 128], strides = [1, 1]} : vector<8x512xf32> to vector<8x128xf32>
    %57 = arith.negf %56 : vector<8x128xf32>
    %58 = math.exp %57 : vector<8x128xf32>
    %cst_15 = arith.constant 1.000000e+00 : f32
    %59 = vector.broadcast %cst_15 : f32 to vector<8x128xf32>
    %60 = arith.addf %59, %58 : vector<8x128xf32>
    %61 = arith.divf %59, %60 : vector<8x128xf32>
    %62 = arith.mulf %47, %30 : vector<8x128xf32>
    %63 = arith.mulf %53, %55 : vector<8x128xf32>
    %64 = arith.addf %62, %63 : vector<8x128xf32>
    %65 = math.tanh %64 : vector<8x128xf32>
    %66 = arith.mulf %61, %65 : vector<8x128xf32>
    %67 = arith.index_cast %c1_i32 : i32 to index
    %c0_16 = arith.constant 0 : index
    %c0_17 = arith.constant 0 : index
    %68 = vector.load %arg3[%67, %c0_16, %c0_17] : memref<8x8x128xf32, #tpu.memory_space<vmem>>, vector<1x8x128xf32>
    %69 = vector.shape_cast %68 : vector<1x8x128xf32> to vector<8x128xf32>
    %70 = vector.shape_cast %66 : vector<8x128xf32> to vector<1x8x128xf32>
    tpu.vector_store %arg3[%67, %c0_16, %c0_17], %70 {strides = array<i32>} : memref<8x8x128xf32, #tpu.memory_space<vmem>>, vector<1x8x128xf32>,
    %c2_i32 = arith.constant 2 : i32
    %71 = arith.index_cast %c2_i32 : i32 to index
    %c0_18 = arith.constant 0 : index
    %c0_19 = arith.constant 0 : index
    %72 = vector.load %arg1[%71, %c0_18, %c0_19] : memref<8x8x512xf32, #tpu.memory_space<vmem>>, vector<1x8x512xf32>
    %73 = vector.shape_cast %72 : vector<1x8x512xf32> to vector<8x512xf32>
    %cst_20 = arith.constant dense<0.000000e+00> : vector<8x512xf32>
    %74 = tpu.matmul %66, %0, %cst_20 {dimension_numbers = #tpu.dot_dimension_numbers<[1], [0], [0], [1], [0, 0, 1, 1], [], []>} : vector<8x128xf32>, vector<128x512xf32>, vector<8x512xf32> -> vector<8x512xf32>
    %75 = arith.addf %73, %74 : vector<8x512xf32>
    %76 = vector.extract_strided_slice %75 {offsets = [0, 0], sizes = [8, 128], strides = [1, 1]} : vector<8x512xf32> to vector<8x128xf32>
    %77 = arith.negf %76 : vector<8x128xf32>
    %78 = math.exp %77 : vector<8x128xf32>
    %cst_21 = arith.constant 1.000000e+00 : f32
    %79 = vector.broadcast %cst_21 : f32 to vector<8x128xf32>
    %80 = arith.addf %79, %78 : vector<8x128xf32>
    %81 = arith.divf %79, %80 : vector<8x128xf32>
    %82 = vector.extract_strided_slice %75 {offsets = [0, 128], sizes = [8, 128], strides = [1, 1]} : vector<8x512xf32> to vector<8x128xf32>
    %83 = arith.negf %82 : vector<8x128xf32>
    %84 = math.exp %83 : vector<8x128xf32>
    %cst_22 = arith.constant 1.000000e+00 : f32
    %85 = vector.broadcast %cst_22 : f32 to vector<8x128xf32>
    %86 = arith.addf %85, %84 : vector<8x128xf32>
    %87 = arith.divf %85, %86 : vector<8x128xf32>
    %88 = vector.extract_strided_slice %75 {offsets = [0, 256], sizes = [8, 128], strides = [1, 1]} : vector<8x512xf32> to vector<8x128xf32>
    %89 = math.tanh %88 : vector<8x128xf32>
    %90 = vector.extract_strided_slice %75 {offsets = [0, 384], sizes = [8, 128], strides = [1, 1]} : vector<8x512xf32> to vector<8x128xf32>
    %91 = arith.negf %90 : vector<8x128xf32>
    %92 = math.exp %91 : vector<8x128xf32>
    %cst_23 = arith.constant 1.000000e+00 : f32
    %93 = vector.broadcast %cst_23 : f32 to vector<8x128xf32>
    %94 = arith.addf %93, %92 : vector<8x128xf32>
    %95 = arith.divf %93, %94 : vector<8x128xf32>
    %96 = arith.mulf %81, %64 : vector<8x128xf32>
    %97 = arith.mulf %87, %89 : vector<8x128xf32>
    %98 = arith.addf %96, %97 : vector<8x128xf32>
    %99 = math.tanh %98 : vector<8x128xf32>
    %100 = arith.mulf %95, %99 : vector<8x128xf32>
    %101 = arith.index_cast %c2_i32 : i32 to index
    %c0_24 = arith.constant 0 : index
    %c0_25 = arith.constant 0 : index
    %102 = vector.load %arg3[%101, %c0_24, %c0_25] : memref<8x8x128xf32, #tpu.memory_space<vmem>>, vector<1x8x128xf32>
    %103 = vector.shape_cast %102 : vector<1x8x128xf32> to vector<8x128xf32>
    %104 = vector.shape_cast %100 : vector<8x128xf32> to vector<1x8x128xf32>
    tpu.vector_store %arg3[%101, %c0_24, %c0_25], %104 {strides = array<i32>} : memref<8x8x128xf32, #tpu.memory_space<vmem>>, vector<1x8x128xf32>,
    %c3_i32 = arith.constant 3 : i32
    %105 = arith.index_cast %c3_i32 : i32 to index
    %c0_26 = arith.constant 0 : index
    %c0_27 = arith.constant 0 : index
    %106 = vector.load %arg1[%105, %c0_26, %c0_27] : memref<8x8x512xf32, #tpu.memory_space<vmem>>, vector<1x8x512xf32>
    %107 = vector.shape_cast %106 : vector<1x8x512xf32> to vector<8x512xf32>
    %cst_28 = arith.constant dense<0.000000e+00> : vector<8x512xf32>
    %108 = tpu.matmul %100, %0, %cst_28 {dimension_numbers = #tpu.dot_dimension_numbers<[1], [0], [0], [1], [0, 0, 1, 1], [], []>} : vector<8x128xf32>, vector<128x512xf32>, vector<8x512xf32> -> vector<8x512xf32>
    %109 = arith.addf %107, %108 : vector<8x512xf32>
    %110 = vector.extract_strided_slice %109 {offsets = [0, 0], sizes = [8, 128], strides = [1, 1]} : vector<8x512xf32> to vector<8x128xf32>
    %111 = arith.negf %110 : vector<8x128xf32>
    %112 = math.exp %111 : vector<8x128xf32>
    %cst_29 = arith.constant 1.000000e+00 : f32
    %113 = vector.broadcast %cst_29 : f32 to vector<8x128xf32>
    %114 = arith.addf %113, %112 : vector<8x128xf32>
    %115 = arith.divf %113, %114 : vector<8x128xf32>
    %116 = vector.extract_strided_slice %109 {offsets = [0, 128], sizes = [8, 128], strides = [1, 1]} : vector<8x512xf32> to vector<8x128xf32>
    %117 = arith.negf %116 : vector<8x128xf32>
    %118 = math.exp %117 : vector<8x128xf32>
    %cst_30 = arith.constant 1.000000e+00 : f32
    %119 = vector.broadcast %cst_30 : f32 to vector<8x128xf32>
    %120 = arith.addf %119, %118 : vector<8x128xf32>
    %121 = arith.divf %119, %120 : vector<8x128xf32>
    %122 = vector.extract_strided_slice %109 {offsets = [0, 256], sizes = [8, 128], strides = [1, 1]} : vector<8x512xf32> to vector<8x128xf32>
    %123 = math.tanh %122 : vector<8x128xf32>
    %124 = vector.extract_strided_slice %109 {offsets = [0, 384], sizes = [8, 128], strides = [1, 1]} : vector<8x512xf32> to vector<8x128xf32>
    %125 = arith.negf %124 : vector<8x128xf32>
    %126 = math.exp %125 : vector<8x128xf32>
    %cst_31 = arith.constant 1.000000e+00 : f32
    %127 = vector.broadcast %cst_31 : f32 to vector<8x128xf32>
    %128 = arith.addf %127, %126 : vector<8x128xf32>
    %129 = arith.divf %127, %128 : vector<8x128xf32>
    %130 = arith.mulf %115, %98 : vector<8x128xf32>
    %131 = arith.mulf %121, %123 : vector<8x128xf32>
    %132 = arith.addf %130, %131 : vector<8x128xf32>
    %133 = math.tanh %132 : vector<8x128xf32>
    %134 = arith.mulf %129, %133 : vector<8x128xf32>
    %135 = arith.index_cast %c3_i32 : i32 to index
    %c0_32 = arith.constant 0 : index
    %c0_33 = arith.constant 0 : index
    %136 = vector.load %arg3[%135, %c0_32, %c0_33] : memref<8x8x128xf32, #tpu.memory_space<vmem>>, vector<1x8x128xf32>
    %137 = vector.shape_cast %136 : vector<1x8x128xf32> to vector<8x128xf32>
    %138 = vector.shape_cast %134 : vector<8x128xf32> to vector<1x8x128xf32>
    tpu.vector_store %arg3[%135, %c0_32, %c0_33], %138 {strides = array<i32>} : memref<8x8x128xf32, #tpu.memory_space<vmem>>, vector<1x8x128xf32>,
    %c4_i32 = arith.constant 4 : i32
    %139 = arith.index_cast %c4_i32 : i32 to index
    %c0_34 = arith.constant 0 : index
    %c0_35 = arith.constant 0 : index
    %140 = vector.load %arg1[%139, %c0_34, %c0_35] : memref<8x8x512xf32, #tpu.memory_space<vmem>>, vector<1x8x512xf32>
    %141 = vector.shape_cast %140 : vector<1x8x512xf32> to vector<8x512xf32>
    %cst_36 = arith.constant dense<0.000000e+00> : vector<8x512xf32>
    %142 = tpu.matmul %134, %0, %cst_36 {dimension_numbers = #tpu.dot_dimension_numbers<[1], [0], [0], [1], [0, 0, 1, 1], [], []>} : vector<8x128xf32>, vector<128x512xf32>, vector<8x512xf32> -> vector<8x512xf32>
    %143 = arith.addf %141, %142 : vector<8x512xf32>
    %144 = vector.extract_strided_slice %143 {offsets = [0, 0], sizes = [8, 128], strides = [1, 1]} : vector<8x512xf32> to vector<8x128xf32>
    %145 = arith.negf %144 : vector<8x128xf32>
    %146 = math.exp %145 : vector<8x128xf32>
    %cst_37 = arith.constant 1.000000e+00 : f32
    %147 = vector.broadcast %cst_37 : f32 to vector<8x128xf32>
    %148 = arith.addf %147, %146 : vector<8x128xf32>
    %149 = arith.divf %147, %148 : vector<8x128xf32>
    %150 = vector.extract_strided_slice %143 {offsets = [0, 128], sizes = [8, 128], strides = [1, 1]} : vector<8x512xf32> to vector<8x128xf32>
    %151 = arith.negf %150 : vector<8x128xf32>
    %152 = math.exp %151 : vector<8x128xf32>
    %cst_38 = arith.constant 1.000000e+00 : f32
    %153 = vector.broadcast %cst_38 : f32 to vector<8x128xf32>
    %154 = arith.addf %153, %152 : vector<8x128xf32>
    %155 = arith.divf %153, %154 : vector<8x128xf32>
    %156 = vector.extract_strided_slice %143 {offsets = [0, 256], sizes = [8, 128], strides = [1, 1]} : vector<8x512xf32> to vector<8x128xf32>
    %157 = math.tanh %156 : vector<8x128xf32>
    %158 = vector.extract_strided_slice %143 {offsets = [0, 384], sizes = [8, 128], strides = [1, 1]} : vector<8x512xf32> to vector<8x128xf32>
    %159 = arith.negf %158 : vector<8x128xf32>
    %160 = math.exp %159 : vector<8x128xf32>
    %cst_39 = arith.constant 1.000000e+00 : f32
    %161 = vector.broadcast %cst_39 : f32 to vector<8x128xf32>
    %162 = arith.addf %161, %160 : vector<8x128xf32>
    %163 = arith.divf %161, %162 : vector<8x128xf32>
    %164 = arith.mulf %149, %132 : vector<8x128xf32>
    %165 = arith.mulf %155, %157 : vector<8x128xf32>
    %166 = arith.addf %164, %165 : vector<8x128xf32>
    %167 = math.tanh %166 : vector<8x128xf32>
    %168 = arith.mulf %163, %167 : vector<8x128xf32>
    %169 = arith.index_cast %c4_i32 : i32 to index
    %c0_40 = arith.constant 0 : index
    %c0_41 = arith.constant 0 : index
    %170 = vector.load %arg3[%169, %c0_40, %c0_41] : memref<8x8x128xf32, #tpu.memory_space<vmem>>, vector<1x8x128xf32>
    %171 = vector.shape_cast %170 : vector<1x8x128xf32> to vector<8x128xf32>
    %172 = vector.shape_cast %168 : vector<8x128xf32> to vector<1x8x128xf32>
    tpu.vector_store %arg3[%169, %c0_40, %c0_41], %172 {strides = array<i32>} : memref<8x8x128xf32, #tpu.memory_space<vmem>>, vector<1x8x128xf32>,
    %c5_i32 = arith.constant 5 : i32
    %173 = arith.index_cast %c5_i32 : i32 to index
    %c0_42 = arith.constant 0 : index
    %c0_43 = arith.constant 0 : index
    %174 = vector.load %arg1[%173, %c0_42, %c0_43] : memref<8x8x512xf32, #tpu.memory_space<vmem>>, vector<1x8x512xf32>
    %175 = vector.shape_cast %174 : vector<1x8x512xf32> to vector<8x512xf32>
    %cst_44 = arith.constant dense<0.000000e+00> : vector<8x512xf32>
    %176 = tpu.matmul %168, %0, %cst_44 {dimension_numbers = #tpu.dot_dimension_numbers<[1], [0], [0], [1], [0, 0, 1, 1], [], []>} : vector<8x128xf32>, vector<128x512xf32>, vector<8x512xf32> -> vector<8x512xf32>
    %177 = arith.addf %175, %176 : vector<8x512xf32>
    %178 = vector.extract_strided_slice %177 {offsets = [0, 0], sizes = [8, 128], strides = [1, 1]} : vector<8x512xf32> to vector<8x128xf32>
    %179 = arith.negf %178 : vector<8x128xf32>
    %180 = math.exp %179 : vector<8x128xf32>
    %cst_45 = arith.constant 1.000000e+00 : f32
    %181 = vector.broadcast %cst_45 : f32 to vector<8x128xf32>
    %182 = arith.addf %181, %180 : vector<8x128xf32>
    %183 = arith.divf %181, %182 : vector<8x128xf32>
    %184 = vector.extract_strided_slice %177 {offsets = [0, 128], sizes = [8, 128], strides = [1, 1]} : vector<8x512xf32> to vector<8x128xf32>
    %185 = arith.negf %184 : vector<8x128xf32>
    %186 = math.exp %185 : vector<8x128xf32>
    %cst_46 = arith.constant 1.000000e+00 : f32
    %187 = vector.broadcast %cst_46 : f32 to vector<8x128xf32>
    %188 = arith.addf %187, %186 : vector<8x128xf32>
    %189 = arith.divf %187, %188 : vector<8x128xf32>
    %190 = vector.extract_strided_slice %177 {offsets = [0, 256], sizes = [8, 128], strides = [1, 1]} : vector<8x512xf32> to vector<8x128xf32>
    %191 = math.tanh %190 : vector<8x128xf32>
    %192 = vector.extract_strided_slice %177 {offsets = [0, 384], sizes = [8, 128], strides = [1, 1]} : vector<8x512xf32> to vector<8x128xf32>
    %193 = arith.negf %192 : vector<8x128xf32>
    %194 = math.exp %193 : vector<8x128xf32>
    %cst_47 = arith.constant 1.000000e+00 : f32
    %195 = vector.broadcast %cst_47 : f32 to vector<8x128xf32>
    %196 = arith.addf %195, %194 : vector<8x128xf32>
    %197 = arith.divf %195, %196 : vector<8x128xf32>
    %198 = arith.mulf %183, %166 : vector<8x128xf32>
    %199 = arith.mulf %189, %191 : vector<8x128xf32>
    %200 = arith.addf %198, %199 : vector<8x128xf32>
    %201 = math.tanh %200 : vector<8x128xf32>
    %202 = arith.mulf %197, %201 : vector<8x128xf32>
    %203 = arith.index_cast %c5_i32 : i32 to index
    %c0_48 = arith.constant 0 : index
    %c0_49 = arith.constant 0 : index
    %204 = vector.load %arg3[%203, %c0_48, %c0_49] : memref<8x8x128xf32, #tpu.memory_space<vmem>>, vector<1x8x128xf32>
    %205 = vector.shape_cast %204 : vector<1x8x128xf32> to vector<8x128xf32>
    %206 = vector.shape_cast %202 : vector<8x128xf32> to vector<1x8x128xf32>
    tpu.vector_store %arg3[%203, %c0_48, %c0_49], %206 {strides = array<i32>} : memref<8x8x128xf32, #tpu.memory_space<vmem>>, vector<1x8x128xf32>,
    %c6_i32 = arith.constant 6 : i32
    %207 = arith.index_cast %c6_i32 : i32 to index
    %c0_50 = arith.constant 0 : index
    %c0_51 = arith.constant 0 : index
    %208 = vector.load %arg1[%207, %c0_50, %c0_51] : memref<8x8x512xf32, #tpu.memory_space<vmem>>, vector<1x8x512xf32>
    %209 = vector.shape_cast %208 : vector<1x8x512xf32> to vector<8x512xf32>
    %cst_52 = arith.constant dense<0.000000e+00> : vector<8x512xf32>
    %210 = tpu.matmul %202, %0, %cst_52 {dimension_numbers = #tpu.dot_dimension_numbers<[1], [0], [0], [1], [0, 0, 1, 1], [], []>} : vector<8x128xf32>, vector<128x512xf32>, vector<8x512xf32> -> vector<8x512xf32>
    %211 = arith.addf %209, %210 : vector<8x512xf32>
    %212 = vector.extract_strided_slice %211 {offsets = [0, 0], sizes = [8, 128], strides = [1, 1]} : vector<8x512xf32> to vector<8x128xf32>
    %213 = arith.negf %212 : vector<8x128xf32>
    %214 = math.exp %213 : vector<8x128xf32>
    %cst_53 = arith.constant 1.000000e+00 : f32
    %215 = vector.broadcast %cst_53 : f32 to vector<8x128xf32>
    %216 = arith.addf %215, %214 : vector<8x128xf32>
    %217 = arith.divf %215, %216 : vector<8x128xf32>
    %218 = vector.extract_strided_slice %211 {offsets = [0, 128], sizes = [8, 128], strides = [1, 1]} : vector<8x512xf32> to vector<8x128xf32>
    %219 = arith.negf %218 : vector<8x128xf32>
    %220 = math.exp %219 : vector<8x128xf32>
    %cst_54 = arith.constant 1.000000e+00 : f32
    %221 = vector.broadcast %cst_54 : f32 to vector<8x128xf32>
    %222 = arith.addf %221, %220 : vector<8x128xf32>
    %223 = arith.divf %221, %222 : vector<8x128xf32>
    %224 = vector.extract_strided_slice %211 {offsets = [0, 256], sizes = [8, 128], strides = [1, 1]} : vector<8x512xf32> to vector<8x128xf32>
    %225 = math.tanh %224 : vector<8x128xf32>
    %226 = vector.extract_strided_slice %211 {offsets = [0, 384], sizes = [8, 128], strides = [1, 1]} : vector<8x512xf32> to vector<8x128xf32>
    %227 = arith.negf %226 : vector<8x128xf32>
    %228 = math.exp %227 : vector<8x128xf32>
    %cst_55 = arith.constant 1.000000e+00 : f32
    %229 = vector.broadcast %cst_55 : f32 to vector<8x128xf32>
    %230 = arith.addf %229, %228 : vector<8x128xf32>
    %231 = arith.divf %229, %230 : vector<8x128xf32>
    %232 = arith.mulf %217, %200 : vector<8x128xf32>
    %233 = arith.mulf %223, %225 : vector<8x128xf32>
    %234 = arith.addf %232, %233 : vector<8x128xf32>
    %235 = math.tanh %234 : vector<8x128xf32>
    %236 = arith.mulf %231, %235 : vector<8x128xf32>
    %237 = arith.index_cast %c6_i32 : i32 to index
    %c0_56 = arith.constant 0 : index
    %c0_57 = arith.constant 0 : index
    %238 = vector.load %arg3[%237, %c0_56, %c0_57] : memref<8x8x128xf32, #tpu.memory_space<vmem>>, vector<1x8x128xf32>
    %239 = vector.shape_cast %238 : vector<1x8x128xf32> to vector<8x128xf32>
    %240 = vector.shape_cast %236 : vector<8x128xf32> to vector<1x8x128xf32>
    tpu.vector_store %arg3[%237, %c0_56, %c0_57], %240 {strides = array<i32>} : memref<8x8x128xf32, #tpu.memory_space<vmem>>, vector<1x8x128xf32>,
    %c7_i32 = arith.constant 7 : i32
    %241 = arith.index_cast %c7_i32 : i32 to index
    %c0_58 = arith.constant 0 : index
    %c0_59 = arith.constant 0 : index
    %242 = vector.load %arg1[%241, %c0_58, %c0_59] : memref<8x8x512xf32, #tpu.memory_space<vmem>>, vector<1x8x512xf32>
    %243 = vector.shape_cast %242 : vector<1x8x512xf32> to vector<8x512xf32>
    %cst_60 = arith.constant dense<0.000000e+00> : vector<8x512xf32>
    %244 = tpu.matmul %236, %0, %cst_60 {dimension_numbers = #tpu.dot_dimension_numbers<[1], [0], [0], [1], [0, 0, 1, 1], [], []>} : vector<8x128xf32>, vector<128x512xf32>, vector<8x512xf32> -> vector<8x512xf32>
    %245 = arith.addf %243, %244 : vector<8x512xf32>
    %246 = vector.extract_strided_slice %245 {offsets = [0, 0], sizes = [8, 128], strides = [1, 1]} : vector<8x512xf32> to vector<8x128xf32>
    %247 = arith.negf %246 : vector<8x128xf32>
    %248 = math.exp %247 : vector<8x128xf32>
    %cst_61 = arith.constant 1.000000e+00 : f32
    %249 = vector.broadcast %cst_61 : f32 to vector<8x128xf32>
    %250 = arith.addf %249, %248 : vector<8x128xf32>
    %251 = arith.divf %249, %250 : vector<8x128xf32>
    %252 = vector.extract_strided_slice %245 {offsets = [0, 128], sizes = [8, 128], strides = [1, 1]} : vector<8x512xf32> to vector<8x128xf32>
    %253 = arith.negf %252 : vector<8x128xf32>
    %254 = math.exp %253 : vector<8x128xf32>
    %cst_62 = arith.constant 1.000000e+00 : f32
    %255 = vector.broadcast %cst_62 : f32 to vector<8x128xf32>
    %256 = arith.addf %255, %254 : vector<8x128xf32>
    %257 = arith.divf %255, %256 : vector<8x128xf32>
    %258 = vector.extract_strided_slice %245 {offsets = [0, 256], sizes = [8, 128], strides = [1, 1]} : vector<8x512xf32> to vector<8x128xf32>
    %259 = math.tanh %258 : vector<8x128xf32>
    %260 = vector.extract_strided_slice %245 {offsets = [0, 384], sizes = [8, 128], strides = [1, 1]} : vector<8x512xf32> to vector<8x128xf32>
    %261 = arith.negf %260 : vector<8x128xf32>
    %262 = math.exp %261 : vector<8x128xf32>
    %cst_63 = arith.constant 1.000000e+00 : f32
    %263 = vector.broadcast %cst_63 : f32 to vector<8x128xf32>
    %264 = arith.addf %263, %262 : vector<8x128xf32>
    %265 = arith.divf %263, %264 : vector<8x128xf32>
    %266 = arith.mulf %251, %234 : vector<8x128xf32>
    %267 = arith.mulf %257, %259 : vector<8x128xf32>
    %268 = arith.addf %266, %267 : vector<8x128xf32>
    %269 = math.tanh %268 : vector<8x128xf32>
    %270 = arith.mulf %265, %269 : vector<8x128xf32>
    %271 = arith.index_cast %c7_i32 : i32 to index
    %c0_64 = arith.constant 0 : index
    %c0_65 = arith.constant 0 : index
    %272 = vector.load %arg3[%271, %c0_64, %c0_65] : memref<8x8x128xf32, #tpu.memory_space<vmem>>, vector<1x8x128xf32>
    %273 = vector.shape_cast %272 : vector<1x8x128xf32> to vector<8x128xf32>
    %274 = vector.shape_cast %270 : vector<8x128xf32> to vector<1x8x128xf32>
    tpu.vector_store %arg3[%271, %c0_64, %c0_65], %274 {strides = array<i32>} : memref<8x8x128xf32, #tpu.memory_space<vmem>>, vector<1x8x128xf32>,
    %c8_i32 = arith.constant 8 : i32
    %c0_66 = arith.constant 0 : index
    %c0_67 = arith.constant 0 : index
    %275 = vector.load %arg4[%c0_66, %c0_67] : memref<8x128xf32, #tpu.memory_space<vmem>>, vector<8x128xf32>
    tpu.vector_store %arg4[%c0_66, %c0_67], %268 {strides = array<i32>} : memref<8x128xf32, #tpu.memory_space<vmem>>, vector<8x128xf32>,
    return
  }
  func.func @transform_0(%arg0: i32) -> (i32, i32, i32) {
    %c0_i32 = arith.constant 0 : i32
    %c0_i32_0 = arith.constant 0 : i32
    %c0_i32_1 = arith.constant 0 : i32
    %c0_i32_2 = arith.constant 0 : i32
    return %c0_i32, %c0_i32_0, %c0_i32_1 : i32, i32, i32
  }
  func.func @transform_1(%arg0: i32) -> (i32, i32) {
    %c0_i32 = arith.constant 0 : i32
    %c0_i32_0 = arith.constant 0 : i32
    %c0_i32_1 = arith.constant 0 : i32
    return %c0_i32, %c0_i32_0 : i32, i32
  }
  func.func @transform_2(%arg0: i32) -> (i32, i32, i32) {
    %c0_i32 = arith.constant 0 : i32
    %c0_i32_0 = arith.constant 0 : i32
    %c0_i32_1 = arith.constant 0 : i32
    %c0_i32_2 = arith.constant 0 : i32
    return %c0_i32, %c0_i32_0, %c0_i32_1 : i32, i32, i32
  }
  func.func @transform_3(%arg0: i32) -> (i32, i32) {
    %c0_i32 = arith.constant 0 : i32
    %c0_i32_0 = arith.constant 0 : i32
    %c0_i32_1 = arith.constant 0 : i32
    return %c0_i32, %c0_i32_0 : i32, i32
  }
}

</mosaic_0001>

<llo_original>
// kernel: tpu_custom_call.1
$region0: #{tpu_custom_call.1}
  #allocation0 [shape = 'u32[]', space=smem, size = 0x4, offset = 0x4, fixed_abs, tag = 'smem constant byte address 0x4 - core index']
  #allocation1 [shape = 'u32[72,128]{1,0:T(1,128)}', space=vmem, size = 0x9000, scoped, tag = 'internal scratch']
  %s0 = inlined_call_operand.hbm [shape: f32[8,8,512], index: 0, kind: input, shape index: {}]
  %s1 = inlined_call_operand.hbm [shape: f32[128,512], index: 1, kind: input, shape index: {}]
  %s2 = inlined_call_operand.hbm [shape: f32[8,8,128], index: 2, kind: output, shape index: {0}]
  %s3 = inlined_call_operand.hbm [shape: f32[8,128], index: 3, kind: output, shape index: {1}]
  %4 = xla_tuple %s2, %s3
  %s5 = sld [smem:[#allocation0]]
  $region34: #{tpu_custom_call.1} parent=0
    _
  %s7 = ssub.s32 1, %s5
  %s8 = scalar_select 0, %s7, %s5
  $region1: #{tpu_custom_call.1} parent=0
    #allocation2 [shape = 'u8[131072]{0}', space=vmem, size = 0x20000, scoped, tag = 'input window, operand 0, single buffered']
    #allocation3 [shape = 's32[1]{0}', space=sflag, size = 0x4, scoped, tag = 'scoped memory for tpu_custom_call.1']
    #allocation4 [shape = 's32[1]{0}', space=sflag, size = 0x4, scoped, tag = 'scoped memory for tpu_custom_call.1']
    #allocation5 [shape = 'u8[262144]{0}', space=vmem, size = 0x40000, scoped, tag = 'input window, operand 1, single buffered']
    #allocation6 [shape = 's32[1]{0}', space=sflag, size = 0x4, scoped, tag = 'scoped memory for tpu_custom_call.1']
    #allocation7 [shape = 'u8[32768]{0}', space=vmem, size = 0x8000, scoped, tag = 'output window, operand 0, single buffered']
    #allocation8 [shape = 'u8[4096]{0}', space=vmem, size = 0x1000, scoped, tag = 'output window, operand 1, single buffered']
    #allocation9 [shape = 's32[1]{0}', space=sflag, size = 0x4, scoped, tag = 'scoped memory for tpu_custom_call.1']
    %9 = vsyncpa [#allocation3], 0
    %10 = vsyncpa [#allocation6], 0
    %11 = vsyncpa [#allocation4], 0
    %12 = vsyncpa [#allocation9], 0
    // Predicated region
    $region2: #{tpu_custom_call.1} parent=1 // pred_check
      _
    $region3: #{tpu_custom_call.1} parent=1 // pred_check_branch
      %14 = sbr.rel (0) target = $region5
    $region4: #{tpu_custom_call.1} parent=1 // pred_region
      %16 = vsyncadd [#allocation3], 0
      %s17 = sshll.u32 %s0, 4
      %s18 = int_to_ptr.hbm [resolvable:$true] %s17
      %s19 = sshll.u32 [#allocation2], 4
      %s20 = int_to_ptr.vmem [resolvable:$true] %s19
      %25 = dma.hbm_to_vmem [thread:$0]  %s18, 4096, %s20, [#allocation3], 512, 512, 32
    $region5: #{tpu_custom_call.1} parent=1 // pred_fallthru
      _
    // Predicated region
    $region6: #{tpu_custom_call.1} parent=1 // pred_check
      _
    $region7: #{tpu_custom_call.1} parent=1 // pred_check_branch
      %27 = sbr.rel (0) target = $region9
    $region8: #{tpu_custom_call.1} parent=1 // pred_region
      %29 = vsyncadd [#allocation6], 0
      %s30 = sshll.u32 %s1, 4
      %s31 = int_to_ptr.hbm [resolvable:$true] %s30
      %s32 = sshll.u32 [#allocation5], 4
      %s33 = int_to_ptr.vmem [resolvable:$true] %s32
      %38 = dma.hbm_to_vmem [thread:$0]  %s31, 8192, %s33, [#allocation6], 512, 512, 32
    $region9: #{tpu_custom_call.1} parent=1 // pred_fallthru
      _
    // Predicated region
    $region10: #{tpu_custom_call.1} parent=1 // pred_check
      _
    $region11: #{tpu_custom_call.1} parent=1 // pred_check_branch
      %40 = sbr.rel (0) target = $region13
    $region12: #{tpu_custom_call.1} parent=1 // pred_region
      %42 = dma.done [#allocation3], 4096
    $region13: #{tpu_custom_call.1} parent=1 // pred_fallthru
      _
    // Predicated region
    $region14: #{tpu_custom_call.1} parent=1 // pred_check
      _
    $region15: #{tpu_custom_call.1} parent=1 // pred_check_branch
      %44 = sbr.rel (0) target = $region17
    $region16: #{tpu_custom_call.1} parent=1 // pred_region
      %46 = dma.done [#allocation6], 8192
    $region17: #{tpu_custom_call.1} parent=1 // pred_fallthru
      _
    %v47 = vld [vmem:[#allocation5] sm:$0xff]
    %v48 = vld [vmem:[#allocation5 + $0x8] sm:$0xff]
    %v49 = vld [vmem:[#allocation5 + $0x10] sm:$0xff]
    %v50 = vld [vmem:[#allocation5 + $0x18] sm:$0xff]
    %v51 = vld [vmem:[#allocation5 + $0x20] sm:$0xff]
    %v52 = vld [vmem:[#allocation5 + $0x28] sm:$0xff]
    %v53 = vld [vmem:[#allocation5 + $0x30] sm:$0xff]
    %v54 = vld [vmem:[#allocation5 + $0x38] sm:$0xff]
    %v55 = vld [vmem:[#allocation5 + $0x40] sm:$0xff]
    %v56 = vld [vmem:[#allocation5 + $0x48] sm:$0xff]
    %v57 = vld [vmem:[#allocation5 + $0x50] sm:$0xff]
    %v58 = vld [vmem:[#allocation5 + $0x58] sm:$0xff]
    %v59 = vld [vmem:[#allocation5 + $0x60] sm:$0xff]
    %v60 = vld [vmem:[#allocation5 + $0x68] sm:$0xff]
    %v61 = vld [vmem:[#allocation5 + $0x70] sm:$0xff]
    %v62 = vld [vmem:[#allocation5 + $0x78] sm:$0xff]
    %v63 = vld [vmem:[#allocation5 + $0x80] sm:$0xff]
    %v64 = vld [vmem:[#allocation5 + $0x88] sm:$0xff]
    %v65 = vld [vmem:[#allocation5 + $0x90] sm:$0xff]
    %v66 = vld [vmem:[#allocation5 + $0x98] sm:$0xff]
    %v67 = vld [vmem:[#allocation5 + $0xa0] sm:$0xff]
    %v68 = vld [vmem:[#allocation5 + $0xa8] sm:$0xff]
    %v69 = vld [vmem:[#allocation5 + $0xb0] sm:$0xff]
    %v70 = vld [vmem:[#allocation5 + $0xb8] sm:$0xff]
    %v71 = vld [vmem:[#allocation5 + $0xc0] sm:$0xff]
    %v72 = vld [vmem:[#allocation5 + $0xc8] sm:$0xff]
    %v73 = vld [vmem:[#allocation5 + $0xd0] sm:$0xff]
    %v74 = vld [vmem:[#allocation5 + $0xd8] sm:$0xff]
    %v75 = vld [vmem:[#allocation5 + $0xe0] sm:$0xff]
    %v76 = vld [vmem:[#allocation5 + $0xe8] sm:$0xff]
    %v77 = vld [vmem:[#allocation5 + $0xf0] sm:$0xff]
    %v78 = vld [vmem:[#allocation5 + $0xf8] sm:$0xff]
    %v79 = vld [vmem:[#allocation5 + $0x100] sm:$0xff]
    %v80 = vld [vmem:[#allocation5 + $0x108] sm:$0xff]
    %v81 = vld [vmem:[#allocation5 + $0x110] sm:$0xff]
    %v82 = vld [vmem:[#allocation5 + $0x118] sm:$0xff]
    %v83 = vld [vmem:[#allocation5 + $0x120] sm:$0xff]
    %v84 = vld [vmem:[#allocation5 + $0x128] sm:$0xff]
    %v85 = vld [vmem:[#allocation5 + $0x130] sm:$0xff]
    %v86 = vld [vmem:[#allocation5 + $0x138] sm:$0xff]
    %v87 = vld [vmem:[#allocation5 + $0x140] sm:$0xff]
    %v88 = vld [vmem:[#allocation5 + $0x148] sm:$0xff]
    %v89 = vld [vmem:[#allocation5 + $0x150] sm:$0xff]
    %v90 = vld [vmem:[#allocation5 + $0x158] sm:$0xff]
    %v91 = vld [vmem:[#allocation5 + $0x160] sm:$0xff]
    %v92 = vld [vmem:[#allocation5 + $0x168] sm:$0xff]
    %v93 = vld [vmem:[#allocation5 + $0x170] sm:$0xff]
    %v94 = vld [vmem:[#allocation5 + $0x178] sm:$0xff]
    %v95 = vld [vmem:[#allocation5 + $0x180] sm:$0xff]
    %v96 = vld [vmem:[#allocation5 + $0x188] sm:$0xff]
    %v97 = vld [vmem:[#allocation5 + $0x190] sm:$0xff]
    %v98 = vld [vmem:[#allocation5 + $0x198] sm:$0xff]
    %v99 = vld [vmem:[#allocation5 + $0x1a0] sm:$0xff]
    %v100 = vld [vmem:[#allocation5 + $0x1a8] sm:$0xff]
    %v101 = vld [vmem:[#allocation5 + $0x1b0] sm:$0xff]
    %v102 = vld [vmem:[#allocation5 + $0x1b8] sm:$0xff]
    %v103 = vld [vmem:[#allocation5 + $0x1c0] sm:$0xff]
    %v104 = vld [vmem:[#allocation5 + $0x1c8] sm:$0xff]
    %v105 = vld [vmem:[#allocation5 + $0x1d0] sm:$0xff]
    %v106 = vld [vmem:[#allocation5 + $0x1d8] sm:$0xff]
    %v107 = vld [vmem:[#allocation5 + $0x1e0] sm:$0xff]
    %v108 = vld [vmem:[#allocation5 + $0x1e8] sm:$0xff]
    %v109 = vld [vmem:[#allocation5 + $0x1f0] sm:$0xff]
    %v110 = vld [vmem:[#allocation5 + $0x1f8] sm:$0xff]
    %v111 = vld [vmem:[#allocation2] sm:$0xff]
    %v112 = vld [vmem:[#allocation2 + $0x8] sm:$0xff]
    %v113 = vld [vmem:[#allocation2 + $0x10] sm:$0xff]
    %v114 = vld [vmem:[#allocation2 + $0x18] sm:$0xff]
    %115 = vmatpush.msra.mxu0 %v107
    %116 = vmatpush.msra.mxu0 %v103
    %117 = vmatpush.msra.mxu0 %v99
    %118 = vmatpush.msra.mxu0 %v95
    %119 = vmatpush.msra.mxu0 %v91
    %120 = vmatpush.msra.mxu0 %v87
    %121 = vmatpush.msra.mxu0 %v83
    %122 = vmatpush.msra.mxu0 %v79
    %123 = vmatpush.msra.mxu0 %v75
    %124 = vmatpush.msra.mxu0 %v71
    %125 = vmatpush.msra.mxu0 %v67
    %126 = vmatpush.msra.mxu0 %v63
    %127 = vmatpush.msra.mxu0 %v59
    %128 = vmatpush.msra.mxu0 %v55
    %129 = vmatpush.msra.mxu0 %v51
    %130 = vmatpush.msra.mxu0 %v47
    %131 = vmatmul.f32.gmra.mxu0 0.0
    %v132 = vpop.f32.mrf.mxu0
    %v133 = vadd.f32 0.0, %v132
    %134 = vdwg.mxu0
    %135 = vmatpush.msra.mxu0 %v108
    %136 = vmatpush.msra.mxu0 %v104
    %137 = vmatpush.msra.mxu0 %v100
    %138 = vmatpush.msra.mxu0 %v96
    %139 = vmatpush.msra.mxu0 %v92
    %140 = vmatpush.msra.mxu0 %v88
    %141 = vmatpush.msra.mxu0 %v84
    %142 = vmatpush.msra.mxu0 %v80
    %143 = vmatpush.msra.mxu0 %v76
    %144 = vmatpush.msra.mxu0 %v72
    %145 = vmatpush.msra.mxu0 %v68
    %146 = vmatpush.msra.mxu0 %v64
    %147 = vmatpush.msra.mxu0 %v60
    %148 = vmatpush.msra.mxu0 %v56
    %149 = vmatpush.msra.mxu0 %v52
    %150 = vmatpush.msra.mxu0 %v48
    %151 = vmatmul.f32.gmra.mxu0 0.0
    %v152 = vpop.f32.mrf.mxu0
    %v153 = vadd.f32 0.0, %v152
    %154 = vdwg.mxu0
    %155 = vmatpush.msra.mxu0 %v109
    %156 = vmatpush.msra.mxu0 %v105
    %157 = vmatpush.msra.mxu0 %v101
    %158 = vmatpush.msra.mxu0 %v97
    %159 = vmatpush.msra.mxu0 %v93
    %160 = vmatpush.msra.mxu0 %v89
    %161 = vmatpush.msra.mxu0 %v85
    %162 = vmatpush.msra.mxu0 %v81
    %163 = vmatpush.msra.mxu0 %v77
    %164 = vmatpush.msra.mxu0 %v73
    %165 = vmatpush.msra.mxu0 %v69
    %166 = vmatpush.msra.mxu0 %v65
    %167 = vmatpush.msra.mxu0 %v61
    %168 = vmatpush.msra.mxu0 %v57
    %169 = vmatpush.msra.mxu0 %v53
    %170 = vmatpush.msra.mxu0 %v49
    %171 = vmatmul.f32.gmra.mxu0 0.0
    %v172 = vpop.f32.mrf.mxu0
    %v173 = vadd.f32 0.0, %v172
    %174 = vdwg.mxu0
    %175 = vmatpush.msra.mxu0 %v110
    %176 = vmatpush.msra.mxu0 %v106
    %177 = vmatpush.msra.mxu0 %v102
    %178 = vmatpush.msra.mxu0 %v98
    %179 = vmatpush.msra.mxu0 %v94
    %180 = vmatpush.msra.mxu0 %v90
    %181 = vmatpush.msra.mxu0 %v86
    %182 = vmatpush.msra.mxu0 %v82
    %183 = vmatpush.msra.mxu0 %v78
    %184 = vmatpush.msra.mxu0 %v74
    %185 = vmatpush.msra.mxu0 %v70
    %186 = vmatpush.msra.mxu0 %v66
    %187 = vmatpush.msra.mxu0 %v62
    %188 = vmatpush.msra.mxu0 %v58
    %189 = vmatpush.msra.mxu0 %v54
    %190 = vmatpush.msra.mxu0 %v50
    %191 = vmatmul.f32.gmra.mxu0 0.0
    %v192 = vpop.f32.mrf.mxu0
    %v193 = vadd.f32 0.0, %v192
    %194 = vdwg.mxu0
    %v195 = vadd.f32 %v111, %v133
    %v196 = vadd.f32 %v112, %v153
    %v197 = vadd.f32 %v113, %v173
    %v198 = vadd.f32 %v114, %v193
    %v199 = vxor.u32 %v195, 2147483648
    %v200 = vmul.f32 %v199, 1.442695
    %v201 = vpow.pop %v200
    %v202 = vadd.f32 %v201, 1.0
    %v203 = vrcp.pop %v202
    %v204 = vmul.f32 %v202, %v203
    %v205 = vsub.f32 1.0, %v204
    %v206 = vmul.f32 %v203, %v205
    %v207 = vadd.f32 %v203, %v206
    %vm208 = vweird.f32 %v202
    %vm209 = vweird.f32 %v203
    %vm210 = vmor %vm208, %vm209
    %v211 = vsel %vm210, %v203, %v207
    %v212 = vand.u32 2147483647, %v202
    %vm213 = vcmp.eq.f32.partialorder %v212, 8.507059e+37
    %v214 = vand.u32 %v202, 2147483648
    %v215 = vor.u32 1.1754944e-38, %v214
    %v216 = vsel %vm213, %v215, %v211
    %v217 = vmul.f32 1.0, %v216
    %v218 = vxor.u32 %v196, 2147483648
    %v219 = vmul.f32 %v218, 1.442695
    %v220 = vpow.pop %v219
    %v221 = vadd.f32 %v220, 1.0
    %v222 = vrcp.pop %v221
    %v223 = vmul.f32 %v221, %v222
    %v224 = vsub.f32 1.0, %v223
    %v225 = vmul.f32 %v222, %v224
    %v226 = vadd.f32 %v222, %v225
    %vm227 = vweird.f32 %v221
    %vm228 = vweird.f32 %v222
    %vm229 = vmor %vm227, %vm228
    %v230 = vsel %vm229, %v222, %v226
    %v231 = vand.u32 2147483647, %v221
    %vm232 = vcmp.eq.f32.partialorder %v231, 8.507059e+37
    %v233 = vand.u32 %v221, 2147483648
    %v234 = vor.u32 1.1754944e-38, %v233
    %v235 = vsel %vm232, %v234, %v230
    %v236 = vmul.f32 1.0, %v235
    %v237 = vtanh.pop %v197
    %v238 = vxor.u32 %v198, 2147483648
    %v239 = vmul.f32 %v238, 1.442695
    %v240 = vpow.pop %v239
    %v241 = vadd.f32 %v240, 1.0
    %v242 = vrcp.pop %v241
    %v243 = vmul.f32 %v241, %v242
    %v244 = vsub.f32 1.0, %v243
    %v245 = vmul.f32 %v242, %v244
    %v246 = vadd.f32 %v242, %v245
    %vm247 = vweird.f32 %v241
    %vm248 = vweird.f32 %v242
    %vm249 = vmor %vm247, %vm248
    %v250 = vsel %vm249, %v242, %v246
    %v251 = vand.u32 2147483647, %v241
    %vm252 = vcmp.eq.f32.partialorder %v251, 8.507059e+37
    %v253 = vand.u32 %v241, 2147483648
    %v254 = vor.u32 1.1754944e-38, %v253
    %v255 = vsel %vm252, %v254, %v250
    %v256 = vmul.f32 1.0, %v255
    %v257 = vmul.f32 %v217, 0.0
    %v258 = vmul.f32 %v236, %v237
    %v259 = vadd.f32 %v257, %v258
    %v260 = vtanh.pop %v259
    %v261 = vmul.f32 %v256, %v260
    %262 = vst [vmem:[#allocation7] sm:$0xff] %v261
    %s263 = scalar_lea.vmem [#allocation2], 32
    %v264 = vld [vmem:[%s263] sm:$0xff]
    %v265 = vld [vmem:[%s263 + $0x8] sm:$0xff]
    %v266 = vld [vmem:[%s263 + $0x10] sm:$0xff]
    %v267 = vld [vmem:[%s263 + $0x18] sm:$0xff]
    %268 = vmatpush.msra.mxu0 %v107
    %269 = vmatpush.msra.mxu0 %v103
    %270 = vmatpush.msra.mxu0 %v99
    %271 = vmatpush.msra.mxu0 %v95
    %272 = vmatpush.msra.mxu0 %v91
    %273 = vmatpush.msra.mxu0 %v87
    %274 = vmatpush.msra.mxu0 %v83
    %275 = vmatpush.msra.mxu0 %v79
    %276 = vmatpush.msra.mxu0 %v75
    %277 = vmatpush.msra.mxu0 %v71
    %278 = vmatpush.msra.mxu0 %v67
    %279 = vmatpush.msra.mxu0 %v63
    %280 = vmatpush.msra.mxu0 %v59
    %281 = vmatpush.msra.mxu0 %v55
    %282 = vmatpush.msra.mxu0 %v51
    %283 = vmatpush.msra.mxu0 %v47
    %284 = vmatmul.f32.gmra.mxu0 %v261
    %v285 = vpop.f32.mrf.mxu0
    %v286 = vadd.f32 0.0, %v285
    %287 = vdwg.mxu0
    %288 = vmatpush.msra.mxu0 %v108
    %289 = vmatpush.msra.mxu0 %v104
    %290 = vmatpush.msra.mxu0 %v100
    %291 = vmatpush.msra.mxu0 %v96
    %292 = vmatpush.msra.mxu0 %v92
    %293 = vmatpush.msra.mxu0 %v88
    %294 = vmatpush.msra.mxu0 %v84
    %295 = vmatpush.msra.mxu0 %v80
    %296 = vmatpush.msra.mxu0 %v76
    %297 = vmatpush.msra.mxu0 %v72
    %298 = vmatpush.msra.mxu0 %v68
    %299 = vmatpush.msra.mxu0 %v64
    %300 = vmatpush.msra.mxu0 %v60
    %301 = vmatpush.msra.mxu0 %v56
    %302 = vmatpush.msra.mxu0 %v52
    %303 = vmatpush.msra.mxu0 %v48
    %304 = vmatmul.f32.gmra.mxu0 %v261
    %v305 = vpop.f32.mrf.mxu0
    %v306 = vadd.f32 0.0, %v305
    %307 = vdwg.mxu0
    %308 = vmatpush.msra.mxu0 %v109
    %309 = vmatpush.msra.mxu0 %v105
    %310 = vmatpush.msra.mxu0 %v101
    %311 = vmatpush.msra.mxu0 %v97
    %312 = vmatpush.msra.mxu0 %v93
    %313 = vmatpush.msra.mxu0 %v89
    %314 = vmatpush.msra.mxu0 %v85
    %315 = vmatpush.msra.mxu0 %v81
    %316 = vmatpush.msra.mxu0 %v77
    %317 = vmatpush.msra.mxu0 %v73
    %318 = vmatpush.msra.mxu0 %v69
    %319 = vmatpush.msra.mxu0 %v65
    %320 = vmatpush.msra.mxu0 %v61
    %321 = vmatpush.msra.mxu0 %v57
    %322 = vmatpush.msra.mxu0 %v53
    %323 = vmatpush.msra.mxu0 %v49
    %324 = vmatmul.f32.gmra.mxu0 %v261
    %v325 = vpop.f32.mrf.mxu0
    %v326 = vadd.f32 0.0, %v325
    %327 = vdwg.mxu0
    %328 = vmatpush.msra.mxu0 %v110
    %329 = vmatpush.msra.mxu0 %v106
    %330 = vmatpush.msra.mxu0 %v102
    %331 = vmatpush.msra.mxu0 %v98
    %332 = vmatpush.msra.mxu0 %v94
    %333 = vmatpush.msra.mxu0 %v90
    %334 = vmatpush.msra.mxu0 %v86
    %335 = vmatpush.msra.mxu0 %v82
    %336 = vmatpush.msra.mxu0 %v78
    %337 = vmatpush.msra.mxu0 %v74
    %338 = vmatpush.msra.mxu0 %v70
    %339 = vmatpush.msra.mxu0 %v66
    %340 = vmatpush.msra.mxu0 %v62
    %341 = vmatpush.msra.mxu0 %v58
    %342 = vmatpush.msra.mxu0 %v54
    %343 = vmatpush.msra.mxu0 %v50
    %344 = vmatmul.f32.gmra.mxu0 %v261
    %v345 = vpop.f32.mrf.mxu0
    %v346 = vadd.f32 0.0, %v345
    %347 = vdwg.mxu0
    %v348 = vadd.f32 %v264, %v286
    %v349 = vadd.f32 %v265, %v306
    %v350 = vadd.f32 %v266, %v326
    %v351 = vadd.f32 %v267, %v346
    %v352 = vxor.u32 %v348, 2147483648
    %v353 = vmul.f32 %v352, 1.442695
    %v354 = vpow.pop %v353
    %v355 = vadd.f32 %v354, 1.0
    %v356 = vrcp.pop %v355
    %v357 = vmul.f32 %v355, %v356
    %v358 = vsub.f32 1.0, %v357
    %v359 = vmul.f32 %v356, %v358
    %v360 = vadd.f32 %v356, %v359
    %vm361 = vweird.f32 %v355
    %vm362 = vweird.f32 %v356
    %vm363 = vmor %vm361, %vm362
    %v364 = vsel %vm363, %v356, %v360
    %v365 = vand.u32 2147483647, %v355
    %vm366 = vcmp.eq.f32.partialorder %v365, 8.507059e+37
    %v367 = vand.u32 %v355, 2147483648
    %v368 = vor.u32 1.1754944e-38, %v367
    %v369 = vsel %vm366, %v368, %v364
    %v370 = vmul.f32 1.0, %v369
    %v371 = vxor.u32 %v349, 2147483648
    %v372 = vmul.f32 %v371, 1.442695
    %v373 = vpow.pop %v372
    %v374 = vadd.f32 %v373, 1.0
    %v375 = vrcp.pop %v374
    %v376 = vmul.f32 %v374, %v375
    %v377 = vsub.f32 1.0, %v376
    %v378 = vmul.f32 %v375, %v377
    %v379 = vadd.f32 %v375, %v378
    %vm380 = vweird.f32 %v374
    %vm381 = vweird.f32 %v375
    %vm382 = vmor %vm380, %vm381
    %v383 = vsel %vm382, %v375, %v379
    %v384 = vand.u32 2147483647, %v374
    %vm385 = vcmp.eq.f32.partialorder %v384, 8.507059e+37
    %v386 = vand.u32 %v374, 2147483648
    %v387 = vor.u32 1.1754944e-38, %v386
    %v388 = vsel %vm385, %v387, %v383
    %v389 = vmul.f32 1.0, %v388
    %v390 = vtanh.pop %v350
    %v391 = vxor.u32 %v351, 2147483648
    %v392 = vmul.f32 %v391, 1.442695
    %v393 = vpow.pop %v392
    %v394 = vadd.f32 %v393, 1.0
    %v395 = vrcp.pop %v394
    %v396 = vmul.f32 %v394, %v395
    %v397 = vsub.f32 1.0, %v396
    %v398 = vmul.f32 %v395, %v397
    %v399 = vadd.f32 %v395, %v398
    %vm400 = vweird.f32 %v394
    %vm401 = vweird.f32 %v395
    %vm402 = vmor %vm400, %vm401
    %v403 = vsel %vm402, %v395, %v399
    %v404 = vand.u32 2147483647, %v394
    %vm405 = vcmp.eq.f32.partialorder %v404, 8.507059e+37
    %v406 = vand.u32 %v394, 2147483648
    %v407 = vor.u32 1.1754944e-38, %v406
    %v408 = vsel %vm405, %v407, %v403
    %v409 = vmul.f32 1.0, %v408
    %v410 = vmul.f32 %v370, %v259
    %v411 = vmul.f32 %v389, %v390
    %v412 = vadd.f32 %v410, %v411
    %v413 = vtanh.pop %v412
    %v414 = vmul.f32 %v409, %v413
    %s415 = scalar_lea.vmem [#allocation7], 8
    %416 = vst [vmem:[%s415] sm:$0xff] %v414
    %s417 = scalar_lea.vmem [#allocation2], 64
    %v418 = vld [vmem:[%s417] sm:$0xff]
    %v419 = vld [vmem:[%s417 + $0x8] sm:$0xff]
    %v420 = vld [vmem:[%s417 + $0x10] sm:$0xff]
    %v421 = vld [vmem:[%s417 + $0x18] sm:$0xff]
    %422 = vmatpush.msra.mxu0 %v107
    %423 = vmatpush.msra.mxu0 %v103
    %424 = vmatpush.msra.mxu0 %v99
    %425 = vmatpush.msra.mxu0 %v95
    %426 = vmatpush.msra.mxu0 %v91
    %427 = vmatpush.msra.mxu0 %v87
    %428 = vmatpush.msra.mxu0 %v83
    %429 = vmatpush.msra.mxu0 %v79
    %430 = vmatpush.msra.mxu0 %v75
    %431 = vmatpush.msra.mxu0 %v71
    %432 = vmatpush.msra.mxu0 %v67
    %433 = vmatpush.msra.mxu0 %v63
    %434 = vmatpush.msra.mxu0 %v59
    %435 = vmatpush.msra.mxu0 %v55
    %436 = vmatpush.msra.mxu0 %v51
    %437 = vmatpush.msra.mxu0 %v47
    %438 = vmatmul.f32.gmra.mxu0 %v414
    %v439 = vpop.f32.mrf.mxu0
    %v440 = vadd.f32 0.0, %v439
    %441 = vdwg.mxu0
    %442 = vmatpush.msra.mxu0 %v108
    %443 = vmatpush.msra.mxu0 %v104
    %444 = vmatpush.msra.mxu0 %v100
    %445 = vmatpush.msra.mxu0 %v96
    %446 = vmatpush.msra.mxu0 %v92
    %447 = vmatpush.msra.mxu0 %v88
    %448 = vmatpush.msra.mxu0 %v84
    %449 = vmatpush.msra.mxu0 %v80
    %450 = vmatpush.msra.mxu0 %v76
    %451 = vmatpush.msra.mxu0 %v72
    %452 = vmatpush.msra.mxu0 %v68
    %453 = vmatpush.msra.mxu0 %v64
    %454 = vmatpush.msra.mxu0 %v60
    %455 = vmatpush.msra.mxu0 %v56
    %456 = vmatpush.msra.mxu0 %v52
    %457 = vmatpush.msra.mxu0 %v48
    %458 = vmatmul.f32.gmra.mxu0 %v414
    %v459 = vpop.f32.mrf.mxu0
    %v460 = vadd.f32 0.0, %v459
    %461 = vdwg.mxu0
    %462 = vmatpush.msra.mxu0 %v109
    %463 = vmatpush.msra.mxu0 %v105
    %464 = vmatpush.msra.mxu0 %v101
    %465 = vmatpush.msra.mxu0 %v97
    %466 = vmatpush.msra.mxu0 %v93
    %467 = vmatpush.msra.mxu0 %v89
    %468 = vmatpush.msra.mxu0 %v85
    %469 = vmatpush.msra.mxu0 %v81
    %470 = vmatpush.msra.mxu0 %v77
    %471 = vmatpush.msra.mxu0 %v73
    %472 = vmatpush.msra.mxu0 %v69
    %473 = vmatpush.msra.mxu0 %v65
    %474 = vmatpush.msra.mxu0 %v61
    %475 = vmatpush.msra.mxu0 %v57
    %476 = vmatpush.msra.mxu0 %v53
    %477 = vmatpush.msra.mxu0 %v49
    %478 = vmatmul.f32.gmra.mxu0 %v414
    %v479 = vpop.f32.mrf.mxu0
    %v480 = vadd.f32 0.0, %v479
    %481 = vdwg.mxu0
    %482 = vmatpush.msra.mxu0 %v110
    %483 = vmatpush.msra.mxu0 %v106
    %484 = vmatpush.msra.mxu0 %v102
    %485 = vmatpush.msra.mxu0 %v98
    %486 = vmatpush.msra.mxu0 %v94
    %487 = vmatpush.msra.mxu0 %v90
    %488 = vmatpush.msra.mxu0 %v86
    %489 = vmatpush.msra.mxu0 %v82
    %490 = vmatpush.msra.mxu0 %v78
    %491 = vmatpush.msra.mxu0 %v74
    %492 = vmatpush.msra.mxu0 %v70
    %493 = vmatpush.msra.mxu0 %v66
    %494 = vmatpush.msra.mxu0 %v62
    %495 = vmatpush.msra.mxu0 %v58
    %496 = vmatpush.msra.mxu0 %v54
    %497 = vmatpush.msra.mxu0 %v50
    %498 = vmatmul.f32.gmra.mxu0 %v414
    %v499 = vpop.f32.mrf.mxu0
    %v500 = vadd.f32 0.0, %v499
    %501 = vdwg.mxu0
    %v502 = vadd.f32 %v418, %v440
    %v503 = vadd.f32 %v419, %v460
    %v504 = vadd.f32 %v420, %v480
    %v505 = vadd.f32 %v421, %v500
    %v506 = vxor.u32 %v502, 2147483648
    %v507 = vmul.f32 %v506, 1.442695
    %v508 = vpow.pop %v507
    %v509 = vadd.f32 %v508, 1.0
    %v510 = vrcp.pop %v509
    %v511 = vmul.f32 %v509, %v510
    %v512 = vsub.f32 1.0, %v511
    %v513 = vmul.f32 %v510, %v512
    %v514 = vadd.f32 %v510, %v513
    %vm515 = vweird.f32 %v509
    %vm516 = vweird.f32 %v510
    %vm517 = vmor %vm515, %vm516
    %v518 = vsel %vm517, %v510, %v514
    %v519 = vand.u32 2147483647, %v509
    %vm520 = vcmp.eq.f32.partialorder %v519, 8.507059e+37
    %v521 = vand.u32 %v509, 2147483648
    %v522 = vor.u32 1.1754944e-38, %v521
    %v523 = vsel %vm520, %v522, %v518
    %v524 = vmul.f32 1.0, %v523
    %v525 = vxor.u32 %v503, 2147483648
    %v526 = vmul.f32 %v525, 1.442695
    %v527 = vpow.pop %v526
    %v528 = vadd.f32 %v527, 1.0
    %v529 = vrcp.pop %v528
    %v530 = vmul.f32 %v528, %v529
    %v531 = vsub.f32 1.0, %v530
    %v532 = vmul.f32 %v529, %v531
    %v533 = vadd.f32 %v529, %v532
    %vm534 = vweird.f32 %v528
    %vm535 = vweird.f32 %v529
    %vm536 = vmor %vm534, %vm535
    %v537 = vsel %vm536, %v529, %v533
    %v538 = vand.u32 2147483647, %v528
    %vm539 = vcmp.eq.f32.partialorder %v538, 8.507059e+37
    %v540 = vand.u32 %v528, 2147483648
    %v541 = vor.u32 1.1754944e-38, %v540
    %v542 = vsel %vm539, %v541, %v537
    %v543 = vmul.f32 1.0, %v542
    %v544 = vtanh.pop %v504
    %v545 = vxor.u32 %v505, 2147483648
    %v546 = vmul.f32 %v545, 1.442695
    %v547 = vpow.pop %v546
    %v548 = vadd.f32 %v547, 1.0
    %v549 = vrcp.pop %v548
    %v550 = vmul.f32 %v548, %v549
    %v551 = vsub.f32 1.0, %v550
    %v552 = vmul.f32 %v549, %v551
    %v553 = vadd.f32 %v549, %v552
    %vm554 = vweird.f32 %v548
    %vm555 = vweird.f32 %v549
    %vm556 = vmor %vm554, %vm555
    %v557 = vsel %vm556, %v549, %v553
    %v558 = vand.u32 2147483647, %v548
    %vm559 = vcmp.eq.f32.partialorder %v558, 8.507059e+37
    %v560 = vand.u32 %v548, 2147483648
    %v561 = vor.u32 1.1754944e-38, %v560
    %v562 = vsel %vm559, %v561, %v557
    %v563 = vmul.f32 1.0, %v562
    %v564 = vmul.f32 %v524, %v412
    %v565 = vmul.f32 %v543, %v544
    %v566 = vadd.f32 %v564, %v565
    %v567 = vtanh.pop %v566
    %v568 = vmul.f32 %v563, %v567
    %s569 = scalar_lea.vmem [#allocation7], 16
    %570 = vst [vmem:[%s569] sm:$0xff] %v568
    %s571 = scalar_lea.vmem [#allocation2], 96
    %v572 = vld [vmem:[%s571] sm:$0xff]
    %v573 = vld [vmem:[%s571 + $0x8] sm:$0xff]
    %v574 = vld [vmem:[%s571 + $0x10] sm:$0xff]
    %v575 = vld [vmem:[%s571 + $0x18] sm:$0xff]
    %576 = vmatpush.msra.mxu0 %v107
    %577 = vmatpush.msra.mxu0 %v103
    %578 = vmatpush.msra.mxu0 %v99
    %579 = vmatpush.msra.mxu0 %v95
    %580 = vmatpush.msra.mxu0 %v91
    %581 = vmatpush.msra.mxu0 %v87
    %582 = vmatpush.msra.mxu0 %v83
    %583 = vmatpush.msra.mxu0 %v79
    %584 = vmatpush.msra.mxu0 %v75
    %585 = vmatpush.msra.mxu0 %v71
    %586 = vmatpush.msra.mxu0 %v67
    %587 = vmatpush.msra.mxu0 %v63
    %588 = vmatpush.msra.mxu0 %v59
    %589 = vmatpush.msra.mxu0 %v55
    %590 = vmatpush.msra.mxu0 %v51
    %591 = vmatpush.msra.mxu0 %v47
    %592 = vmatmul.f32.gmra.mxu0 %v568
    %v593 = vpop.f32.mrf.mxu0
    %v594 = vadd.f32 0.0, %v593
    %595 = vdwg.mxu0
    %596 = vmatpush.msra.mxu0 %v108
    %597 = vmatpush.msra.mxu0 %v104
    %598 = vmatpush.msra.mxu0 %v100
    %599 = vmatpush.msra.mxu0 %v96
    %600 = vmatpush.msra.mxu0 %v92
    %601 = vmatpush.msra.mxu0 %v88
    %602 = vmatpush.msra.mxu0 %v84
    %603 = vmatpush.msra.mxu0 %v80
    %604 = vmatpush.msra.mxu0 %v76
    %605 = vmatpush.msra.mxu0 %v72
    %606 = vmatpush.msra.mxu0 %v68
    %607 = vmatpush.msra.mxu0 %v64
    %608 = vmatpush.msra.mxu0 %v60
    %609 = vmatpush.msra.mxu0 %v56
    %610 = vmatpush.msra.mxu0 %v52
    %611 = vmatpush.msra.mxu0 %v48
    %612 = vmatmul.f32.gmra.mxu0 %v568
    %v613 = vpop.f32.mrf.mxu0
    %v614 = vadd.f32 0.0, %v613
    %615 = vdwg.mxu0
    %616 = vmatpush.msra.mxu0 %v109
    %617 = vmatpush.msra.mxu0 %v105
    %618 = vmatpush.msra.mxu0 %v101
    %619 = vmatpush.msra.mxu0 %v97
    %620 = vmatpush.msra.mxu0 %v93
    %621 = vmatpush.msra.mxu0 %v89
    %622 = vmatpush.msra.mxu0 %v85
    %623 = vmatpush.msra.mxu0 %v81
    %624 = vmatpush.msra.mxu0 %v77
    %625 = vmatpush.msra.mxu0 %v73
    %626 = vmatpush.msra.mxu0 %v69
    %627 = vmatpush.msra.mxu0 %v65
    %628 = vmatpush.msra.mxu0 %v61
    %629 = vmatpush.msra.mxu0 %v57
    %630 = vmatpush.msra.mxu0 %v53
    %631 = vmatpush.msra.mxu0 %v49
    %632 = vmatmul.f32.gmra.mxu0 %v568
    %v633 = vpop.f32.mrf.mxu0
    %v634 = vadd.f32 0.0, %v633
    %635 = vdwg.mxu0
    %636 = vmatpush.msra.mxu0 %v110
    %637 = vmatpush.msra.mxu0 %v106
    %638 = vmatpush.msra.mxu0 %v102
    %639 = vmatpush.msra.mxu0 %v98
    %640 = vmatpush.msra.mxu0 %v94
    %641 = vmatpush.msra.mxu0 %v90
    %642 = vmatpush.msra.mxu0 %v86
    %643 = vmatpush.msra.mxu0 %v82
    %644 = vmatpush.msra.mxu0 %v78
    %645 = vmatpush.msra.mxu0 %v74
    %646 = vmatpush.msra.mxu0 %v70
    %647 = vmatpush.msra.mxu0 %v66
    %648 = vmatpush.msra.mxu0 %v62
    %649 = vmatpush.msra.mxu0 %v58
    %650 = vmatpush.msra.mxu0 %v54
    %651 = vmatpush.msra.mxu0 %v50
    %652 = vmatmul.f32.gmra.mxu0 %v568
    %v653 = vpop.f32.mrf.mxu0
    %v654 = vadd.f32 0.0, %v653
    %655 = vdwg.mxu0
    %v656 = vadd.f32 %v572, %v594
    %v657 = vadd.f32 %v573, %v614
    %v658 = vadd.f32 %v574, %v634
    %v659 = vadd.f32 %v575, %v654
    %v660 = vxor.u32 %v656, 2147483648
    %v661 = vmul.f32 %v660, 1.442695
    %v662 = vpow.pop %v661
    %v663 = vadd.f32 %v662, 1.0
    %v664 = vrcp.pop %v663
    %v665 = vmul.f32 %v663, %v664
    %v666 = vsub.f32 1.0, %v665
    %v667 = vmul.f32 %v664, %v666
    %v668 = vadd.f32 %v664, %v667
    %vm669 = vweird.f32 %v663
    %vm670 = vweird.f32 %v664
    %vm671 = vmor %vm669, %vm670
    %v672 = vsel %vm671, %v664, %v668
    %v673 = vand.u32 2147483647, %v663
    %vm674 = vcmp.eq.f32.partialorder %v673, 8.507059e+37
    %v675 = vand.u32 %v663, 2147483648
    %v676 = vor.u32 1.1754944e-38, %v675
    %v677 = vsel %vm674, %v676, %v672
    %v678 = vmul.f32 1.0, %v677
    %v679 = vxor.u32 %v657, 2147483648
    %v680 = vmul.f32 %v679, 1.442695
    %v681 = vpow.pop %v680
    %v682 = vadd.f32 %v681, 1.0
    %v683 = vrcp.pop %v682
    %v684 = vmul.f32 %v682, %v683
    %v685 = vsub.f32 1.0, %v684
    %v686 = vmul.f32 %v683, %v685
    %v687 = vadd.f32 %v683, %v686
    %vm688 = vweird.f32 %v682
    %vm689 = vweird.f32 %v683
    %vm690 = vmor %vm688, %vm689
    %v691 = vsel %vm690, %v683, %v687
    %v692 = vand.u32 2147483647, %v682
    %vm693 = vcmp.eq.f32.partialorder %v692, 8.507059e+37
    %v694 = vand.u32 %v682, 2147483648
    %v695 = vor.u32 1.1754944e-38, %v694
    %v696 = vsel %vm693, %v695, %v691
    %v697 = vmul.f32 1.0, %v696
    %v698 = vtanh.pop %v658
    %v699 = vxor.u32 %v659, 2147483648
    %v700 = vmul.f32 %v699, 1.442695
    %v701 = vpow.pop %v700
    %v702 = vadd.f32 %v701, 1.0
    %v703 = vrcp.pop %v702
    %v704 = vmul.f32 %v702, %v703
    %v705 = vsub.f32 1.0, %v704
    %v706 = vmul.f32 %v703, %v705
    %v707 = vadd.f32 %v703, %v706
    %vm708 = vweird.f32 %v702
    %vm709 = vweird.f32 %v703
    %vm710 = vmor %vm708, %vm709
    %v711 = vsel %vm710, %v703, %v707
    %v712 = vand.u32 2147483647, %v702
    %vm713 = vcmp.eq.f32.partialorder %v712, 8.507059e+37
    %v714 = vand.u32 %v702, 2147483648
    %v715 = vor.u32 1.1754944e-38, %v714
    %v716 = vsel %vm713, %v715, %v711
    %v717 = vmul.f32 1.0, %v716
    %v718 = vmul.f32 %v678, %v566
    %v719 = vmul.f32 %v697, %v698
    %v720 = vadd.f32 %v718, %v719
    %v721 = vtanh.pop %v720
    %v722 = vmul.f32 %v717, %v721
    %s723 = scalar_lea.vmem [#allocation7], 24
    %724 = vst [vmem:[%s723] sm:$0xff] %v722
    %s725 = scalar_lea.vmem [#allocation2], 128
    %v726 = vld [vmem:[%s725] sm:$0xff]
    %v727 = vld [vmem:[%s725 + $0x8] sm:$0xff]
    %v728 = vld [vmem:[%s725 + $0x10] sm:$0xff]
    %v729 = vld [vmem:[%s725 + $0x18] sm:$0xff]
    %730 = vmatpush.msra.mxu0 %v107
    %731 = vmatpush.msra.mxu0 %v103
    %732 = vmatpush.msra.mxu0 %v99
    %733 = vmatpush.msra.mxu0 %v95
    %734 = vmatpush.msra.mxu0 %v91
    %735 = vmatpush.msra.mxu0 %v87
    %736 = vmatpush.msra.mxu0 %v83
    %737 = vmatpush.msra.mxu0 %v79
    %738 = vmatpush.msra.mxu0 %v75
    %739 = vmatpush.msra.mxu0 %v71
    %740 = vmatpush.msra.mxu0 %v67
    %741 = vmatpush.msra.mxu0 %v63
    %742 = vmatpush.msra.mxu0 %v59
    %743 = vmatpush.msra.mxu0 %v55
    %744 = vmatpush.msra.mxu0 %v51
    %745 = vmatpush.msra.mxu0 %v47
    %746 = vmatmul.f32.gmra.mxu0 %v722
    %v747 = vpop.f32.mrf.mxu0
    %v748 = vadd.f32 0.0, %v747
    %749 = vdwg.mxu0
    %750 = vmatpush.msra.mxu0 %v108
    %751 = vmatpush.msra.mxu0 %v104
    %752 = vmatpush.msra.mxu0 %v100
    %753 = vmatpush.msra.mxu0 %v96
    %754 = vmatpush.msra.mxu0 %v92
    %755 = vmatpush.msra.mxu0 %v88
    %756 = vmatpush.msra.mxu0 %v84
    %757 = vmatpush.msra.mxu0 %v80
    %758 = vmatpush.msra.mxu0 %v76
    %759 = vmatpush.msra.mxu0 %v72
    %760 = vmatpush.msra.mxu0 %v68
    %761 = vmatpush.msra.mxu0 %v64
    %762 = vmatpush.msra.mxu0 %v60
    %763 = vmatpush.msra.mxu0 %v56
    %764 = vmatpush.msra.mxu0 %v52
    %765 = vmatpush.msra.mxu0 %v48
    %766 = vmatmul.f32.gmra.mxu0 %v722
    %v767 = vpop.f32.mrf.mxu0
    %v768 = vadd.f32 0.0, %v767
    %769 = vdwg.mxu0
    %770 = vmatpush.msra.mxu0 %v109
    %771 = vmatpush.msra.mxu0 %v105
    %772 = vmatpush.msra.mxu0 %v101
    %773 = vmatpush.msra.mxu0 %v97
    %774 = vmatpush.msra.mxu0 %v93
    %775 = vmatpush.msra.mxu0 %v89
    %776 = vmatpush.msra.mxu0 %v85
    %777 = vmatpush.msra.mxu0 %v81
    %778 = vmatpush.msra.mxu0 %v77
    %779 = vmatpush.msra.mxu0 %v73
    %780 = vmatpush.msra.mxu0 %v69
    %781 = vmatpush.msra.mxu0 %v65
    %782 = vmatpush.msra.mxu0 %v61
    %783 = vmatpush.msra.mxu0 %v57
    %784 = vmatpush.msra.mxu0 %v53
    %785 = vmatpush.msra.mxu0 %v49
    %786 = vmatmul.f32.gmra.mxu0 %v722
    %v787 = vpop.f32.mrf.mxu0
    %v788 = vadd.f32 0.0, %v787
    %789 = vdwg.mxu0
    %790 = vmatpush.msra.mxu0 %v110
    %791 = vmatpush.msra.mxu0 %v106
    %792 = vmatpush.msra.mxu0 %v102
    %793 = vmatpush.msra.mxu0 %v98
    %794 = vmatpush.msra.mxu0 %v94
    %795 = vmatpush.msra.mxu0 %v90
    %796 = vmatpush.msra.mxu0 %v86
    %797 = vmatpush.msra.mxu0 %v82
    %798 = vmatpush.msra.mxu0 %v78
    %799 = vmatpush.msra.mxu0 %v74
    %800 = vmatpush.msra.mxu0 %v70
    %801 = vmatpush.msra.mxu0 %v66
    %802 = vmatpush.msra.mxu0 %v62
    %803 = vmatpush.msra.mxu0 %v58
    %804 = vmatpush.msra.mxu0 %v54
    %805 = vmatpush.msra.mxu0 %v50
    %806 = vmatmul.f32.gmra.mxu0 %v722
    %v807 = vpop.f32.mrf.mxu0
    %v808 = vadd.f32 0.0, %v807
    %809 = vdwg.mxu0
    %v810 = vadd.f32 %v726, %v748
    %v811 = vadd.f32 %v727, %v768
    %v812 = vadd.f32 %v728, %v788
    %v813 = vadd.f32 %v729, %v808
    %v814 = vxor.u32 %v810, 2147483648
    %v815 = vmul.f32 %v814, 1.442695
    %v816 = vpow.pop %v815
    %v817 = vadd.f32 %v816, 1.0
    %v818 = vrcp.pop %v817
    %v819 = vmul.f32 %v817, %v818
    %v820 = vsub.f32 1.0, %v819
    %v821 = vmul.f32 %v818, %v820
    %v822 = vadd.f32 %v818, %v821
    %vm823 = vweird.f32 %v817
    %vm824 = vweird.f32 %v818
    %vm825 = vmor %vm823, %vm824
    %v826 = vsel %vm825, %v818, %v822
    %v827 = vand.u32 2147483647, %v817
    %vm828 = vcmp.eq.f32.partialorder %v827, 8.507059e+37
    %v829 = vand.u32 %v817, 2147483648
    %v830 = vor.u32 1.1754944e-38, %v829
    %v831 = vsel %vm828, %v830, %v826
    %v832 = vmul.f32 1.0, %v831
    %v833 = vxor.u32 %v811, 2147483648
    %v834 = vmul.f32 %v833, 1.442695
    %v835 = vpow.pop %v834
    %v836 = vadd.f32 %v835, 1.0
    %v837 = vrcp.pop %v836
    %v838 = vmul.f32 %v836, %v837
    %v839 = vsub.f32 1.0, %v838
    %v840 = vmul.f32 %v837, %v839
    %v841 = vadd.f32 %v837, %v840
    %vm842 = vweird.f32 %v836
    %vm843 = vweird.f32 %v837
    %vm844 = vmor %vm842, %vm843
    %v845 = vsel %vm844, %v837, %v841
    %v846 = vand.u32 2147483647, %v836
    %vm847 = vcmp.eq.f32.partialorder %v846, 8.507059e+37
    %v848 = vand.u32 %v836, 2147483648
    %v849 = vor.u32 1.1754944e-38, %v848
    %v850 = vsel %vm847, %v849, %v845
    %v851 = vmul.f32 1.0, %v850
    %v852 = vtanh.pop %v812
    %v853 = vxor.u32 %v813, 2147483648
    %v854 = vmul.f32 %v853, 1.442695
    %v855 = vpow.pop %v854
    %v856 = vadd.f32 %v855, 1.0
    %v857 = vrcp.pop %v856
    %v858 = vmul.f32 %v856, %v857
    %v859 = vsub.f32 1.0, %v858
    %v860 = vmul.f32 %v857, %v859
    %v861 = vadd.f32 %v857, %v860
    %vm862 = vweird.f32 %v856
    %vm863 = vweird.f32 %v857
    %vm864 = vmor %vm862, %vm863
    %v865 = vsel %vm864, %v857, %v861
    %v866 = vand.u32 2147483647, %v856
    %vm867 = vcmp.eq.f32.partialorder %v866, 8.507059e+37
    %v868 = vand.u32 %v856, 2147483648
    %v869 = vor.u32 1.1754944e-38, %v868
    %v870 = vsel %vm867, %v869, %v865
    %v871 = vmul.f32 1.0, %v870
    %v872 = vmul.f32 %v832, %v720
    %v873 = vmul.f32 %v851, %v852
    %v874 = vadd.f32 %v872, %v873
    %v875 = vtanh.pop %v874
    %v876 = vmul.f32 %v871, %v875
    %s877 = scalar_lea.vmem [#allocation7], 32
    %878 = vst [vmem:[%s877] sm:$0xff] %v876
    %s879 = scalar_lea.vmem [#allocation2], 160
    %v880 = vld [vmem:[%s879] sm:$0xff]
    %v881 = vld [vmem:[%s879 + $0x8] sm:$0xff]
    %v882 = vld [vmem:[%s879 + $0x10] sm:$0xff]
    %v883 = vld [vmem:[%s879 + $0x18] sm:$0xff]
    %884 = vmatpush.msra.mxu0 %v107
    %885 = vmatpush.msra.mxu0 %v103
    %886 = vmatpush.msra.mxu0 %v99
    %887 = vmatpush.msra.mxu0 %v95
    %888 = vmatpush.msra.mxu0 %v91
    %889 = vmatpush.msra.mxu0 %v87
    %890 = vmatpush.msra.mxu0 %v83
    %891 = vmatpush.msra.mxu0 %v79
    %892 = vmatpush.msra.mxu0 %v75
    %893 = vmatpush.msra.mxu0 %v71
    %894 = vmatpush.msra.mxu0 %v67
    %895 = vmatpush.msra.mxu0 %v63
    %896 = vmatpush.msra.mxu0 %v59
    %897 = vmatpush.msra.mxu0 %v55
    %898 = vmatpush.msra.mxu0 %v51
    %899 = vmatpush.msra.mxu0 %v47
    %900 = vmatmul.f32.gmra.mxu0 %v876
    %v901 = vpop.f32.mrf.mxu0
    %v902 = vadd.f32 0.0, %v901
    %903 = vdwg.mxu0
    %904 = vmatpush.msra.mxu0 %v108
    %905 = vmatpush.msra.mxu0 %v104
    %906 = vmatpush.msra.mxu0 %v100
    %907 = vmatpush.msra.mxu0 %v96
    %908 = vmatpush.msra.mxu0 %v92
    %909 = vmatpush.msra.mxu0 %v88
    %910 = vmatpush.msra.mxu0 %v84
    %911 = vmatpush.msra.mxu0 %v80
    %912 = vmatpush.msra.mxu0 %v76
    %913 = vmatpush.msra.mxu0 %v72
    %914 = vmatpush.msra.mxu0 %v68
    %915 = vmatpush.msra.mxu0 %v64
    %916 = vmatpush.msra.mxu0 %v60
    %917 = vmatpush.msra.mxu0 %v56
    %918 = vmatpush.msra.mxu0 %v52
    %919 = vmatpush.msra.mxu0 %v48
    %920 = vmatmul.f32.gmra.mxu0 %v876
    %v921 = vpop.f32.mrf.mxu0
    %v922 = vadd.f32 0.0, %v921
    %923 = vdwg.mxu0
    %924 = vmatpush.msra.mxu0 %v109
    %925 = vmatpush.msra.mxu0 %v105
    %926 = vmatpush.msra.mxu0 %v101
    %927 = vmatpush.msra.mxu0 %v97
    %928 = vmatpush.msra.mxu0 %v93
    %929 = vmatpush.msra.mxu0 %v89
    %930 = vmatpush.msra.mxu0 %v85
    %931 = vmatpush.msra.mxu0 %v81
    %932 = vmatpush.msra.mxu0 %v77
    %933 = vmatpush.msra.mxu0 %v73
    %934 = vmatpush.msra.mxu0 %v69
    %935 = vmatpush.msra.mxu0 %v65
    %936 = vmatpush.msra.mxu0 %v61
    %937 = vmatpush.msra.mxu0 %v57
    %938 = vmatpush.msra.mxu0 %v53
    %939 = vmatpush.msra.mxu0 %v49
    %940 = vmatmul.f32.gmra.mxu0 %v876
    %v941 = vpop.f32.mrf.mxu0
    %v942 = vadd.f32 0.0, %v941
    %943 = vdwg.mxu0
    %944 = vmatpush.msra.mxu0 %v110
    %945 = vmatpush.msra.mxu0 %v106
    %946 = vmatpush.msra.mxu0 %v102
    %947 = vmatpush.msra.mxu0 %v98
    %948 = vmatpush.msra.mxu0 %v94
    %949 = vmatpush.msra.mxu0 %v90
    %950 = vmatpush.msra.mxu0 %v86
    %951 = vmatpush.msra.mxu0 %v82
    %952 = vmatpush.msra.mxu0 %v78
    %953 = vmatpush.msra.mxu0 %v74
    %954 = vmatpush.msra.mxu0 %v70
    %955 = vmatpush.msra.mxu0 %v66
    %956 = vmatpush.msra.mxu0 %v62
    %957 = vmatpush.msra.mxu0 %v58
    %958 = vmatpush.msra.mxu0 %v54
    %959 = vmatpush.msra.mxu0 %v50
    %960 = vmatmul.f32.gmra.mxu0 %v876
    %v961 = vpop.f32.mrf.mxu0
    %v962 = vadd.f32 0.0, %v961
    %963 = vdwg.mxu0
    %v964 = vadd.f32 %v880, %v902
    %v965 = vadd.f32 %v881, %v922
    %v966 = vadd.f32 %v882, %v942
    %v967 = vadd.f32 %v883, %v962
    %v968 = vxor.u32 %v964, 2147483648
    %v969 = vmul.f32 %v968, 1.442695
    %v970 = vpow.pop %v969
    %v971 = vadd.f32 %v970, 1.0
    %v972 = vrcp.pop %v971
    %v973 = vmul.f32 %v971, %v972
    %v974 = vsub.f32 1.0, %v973
    %v975 = vmul.f32 %v972, %v974
    %v976 = vadd.f32 %v972, %v975
    %vm977 = vweird.f32 %v971
    %vm978 = vweird.f32 %v972
    %vm979 = vmor %vm977, %vm978
    %v980 = vsel %vm979, %v972, %v976
    %v981 = vand.u32 2147483647, %v971
    %vm982 = vcmp.eq.f32.partialorder %v981, 8.507059e+37
    %v983 = vand.u32 %v971, 2147483648
    %v984 = vor.u32 1.1754944e-38, %v983
    %v985 = vsel %vm982, %v984, %v980
    %v986 = vmul.f32 1.0, %v985
    %v987 = vxor.u32 %v965, 2147483648
    %v988 = vmul.f32 %v987, 1.442695
    %v989 = vpow.pop %v988
    %v990 = vadd.f32 %v989, 1.0
    %v991 = vrcp.pop %v990
    %v992 = vmul.f32 %v990, %v991
    %v993 = vsub.f32 1.0, %v992
    %v994 = vmul.f32 %v991, %v993
    %v995 = vadd.f32 %v991, %v994
    %vm996 = vweird.f32 %v990
    %vm997 = vweird.f32 %v991
    %vm998 = vmor %vm996, %vm997
    %v999 = vsel %vm998, %v991, %v995
    %v1000 = vand.u32 2147483647, %v990
    %vm1001 = vcmp.eq.f32.partialorder %v1000, 8.507059e+37
    %v1002 = vand.u32 %v990, 2147483648
    %v1003 = vor.u32 1.1754944e-38, %v1002
    %v1004 = vsel %vm1001, %v1003, %v999
    %v1005 = vmul.f32 1.0, %v1004
    %v1006 = vtanh.pop %v966
    %v1007 = vxor.u32 %v967, 2147483648
    %v1008 = vmul.f32 %v1007, 1.442695
    %v1009 = vpow.pop %v1008
    %v1010 = vadd.f32 %v1009, 1.0
    %v1011 = vrcp.pop %v1010
    %v1012 = vmul.f32 %v1010, %v1011
    %v1013 = vsub.f32 1.0, %v1012
    %v1014 = vmul.f32 %v1011, %v1013
    %v1015 = vadd.f32 %v1011, %v1014
    %vm1016 = vweird.f32 %v1010
    %vm1017 = vweird.f32 %v1011
    %vm1018 = vmor %vm1016, %vm1017
    %v1019 = vsel %vm1018, %v1011, %v1015
    %v1020 = vand.u32 2147483647, %v1010
    %vm1021 = vcmp.eq.f32.partialorder %v1020, 8.507059e+37
    %v1022 = vand.u32 %v1010, 2147483648
    %v1023 = vor.u32 1.1754944e-38, %v1022
    %v1024 = vsel %vm1021, %v1023, %v1019
    %v1025 = vmul.f32 1.0, %v1024
    %v1026 = vmul.f32 %v986, %v874
    %v1027 = vmul.f32 %v1005, %v1006
    %v1028 = vadd.f32 %v1026, %v1027
    %v1029 = vtanh.pop %v1028
    %v1030 = vmul.f32 %v1025, %v1029
    %s1031 = scalar_lea.vmem [#allocation7], 40
    %1032 = vst [vmem:[%s1031] sm:$0xff] %v1030
    %s1033 = scalar_lea.vmem [#allocation2], 192
    %v1034 = vld [vmem:[%s1033] sm:$0xff]
    %v1035 = vld [vmem:[%s1033 + $0x8] sm:$0xff]
    %v1036 = vld [vmem:[%s1033 + $0x10] sm:$0xff]
    %v1037 = vld [vmem:[%s1033 + $0x18] sm:$0xff]
    %1038 = vmatpush.msra.mxu0 %v107
    %1039 = vmatpush.msra.mxu0 %v103
    %1040 = vmatpush.msra.mxu0 %v99
    %1041 = vmatpush.msra.mxu0 %v95
    %1042 = vmatpush.msra.mxu0 %v91
    %1043 = vmatpush.msra.mxu0 %v87
    %1044 = vmatpush.msra.mxu0 %v83
    %1045 = vmatpush.msra.mxu0 %v79
    %1046 = vmatpush.msra.mxu0 %v75
    %1047 = vmatpush.msra.mxu0 %v71
    %1048 = vmatpush.msra.mxu0 %v67
    %1049 = vmatpush.msra.mxu0 %v63
    %1050 = vmatpush.msra.mxu0 %v59
    %1051 = vmatpush.msra.mxu0 %v55
    %1052 = vmatpush.msra.mxu0 %v51
    %1053 = vmatpush.msra.mxu0 %v47
    %1054 = vmatmul.f32.gmra.mxu0 %v1030
    %v1055 = vpop.f32.mrf.mxu0
    %v1056 = vadd.f32 0.0, %v1055
    %1057 = vdwg.mxu0
    %1058 = vmatpush.msra.mxu0 %v108
    %1059 = vmatpush.msra.mxu0 %v104
    %1060 = vmatpush.msra.mxu0 %v100
    %1061 = vmatpush.msra.mxu0 %v96
    %1062 = vmatpush.msra.mxu0 %v92
    %1063 = vmatpush.msra.mxu0 %v88
    %1064 = vmatpush.msra.mxu0 %v84
    %1065 = vmatpush.msra.mxu0 %v80
    %1066 = vmatpush.msra.mxu0 %v76
    %1067 = vmatpush.msra.mxu0 %v72
    %1068 = vmatpush.msra.mxu0 %v68
    %1069 = vmatpush.msra.mxu0 %v64
    %1070 = vmatpush.msra.mxu0 %v60
    %1071 = vmatpush.msra.mxu0 %v56
    %1072 = vmatpush.msra.mxu0 %v52
    %1073 = vmatpush.msra.mxu0 %v48
    %1074 = vmatmul.f32.gmra.mxu0 %v1030
    %v1075 = vpop.f32.mrf.mxu0
    %v1076 = vadd.f32 0.0, %v1075
    %1077 = vdwg.mxu0
    %1078 = vmatpush.msra.mxu0 %v109
    %1079 = vmatpush.msra.mxu0 %v105
    %1080 = vmatpush.msra.mxu0 %v101
    %1081 = vmatpush.msra.mxu0 %v97
    %1082 = vmatpush.msra.mxu0 %v93
    %1083 = vmatpush.msra.mxu0 %v89
    %1084 = vmatpush.msra.mxu0 %v85
    %1085 = vmatpush.msra.mxu0 %v81
    %1086 = vmatpush.msra.mxu0 %v77
    %1087 = vmatpush.msra.mxu0 %v73
    %1088 = vmatpush.msra.mxu0 %v69
    %1089 = vmatpush.msra.mxu0 %v65
    %1090 = vmatpush.msra.mxu0 %v61
    %1091 = vmatpush.msra.mxu0 %v57
    %1092 = vmatpush.msra.mxu0 %v53
    %1093 = vmatpush.msra.mxu0 %v49
    %1094 = vmatmul.f32.gmra.mxu0 %v1030
    %v1095 = vpop.f32.mrf.mxu0
    %v1096 = vadd.f32 0.0, %v1095
    %1097 = vdwg.mxu0
    %1098 = vmatpush.msra.mxu0 %v110
    %1099 = vmatpush.msra.mxu0 %v106
    %1100 = vmatpush.msra.mxu0 %v102
    %1101 = vmatpush.msra.mxu0 %v98
    %1102 = vmatpush.msra.mxu0 %v94
    %1103 = vmatpush.msra.mxu0 %v90
    %1104 = vmatpush.msra.mxu0 %v86
    %1105 = vmatpush.msra.mxu0 %v82
    %1106 = vmatpush.msra.mxu0 %v78
    %1107 = vmatpush.msra.mxu0 %v74
    %1108 = vmatpush.msra.mxu0 %v70
    %1109 = vmatpush.msra.mxu0 %v66
    %1110 = vmatpush.msra.mxu0 %v62
    %1111 = vmatpush.msra.mxu0 %v58
    %1112 = vmatpush.msra.mxu0 %v54
    %1113 = vmatpush.msra.mxu0 %v50
    %1114 = vmatmul.f32.gmra.mxu0 %v1030
    %v1115 = vpop.f32.mrf.mxu0
    %v1116 = vadd.f32 0.0, %v1115
    %1117 = vdwg.mxu0
    %v1118 = vadd.f32 %v1034, %v1056
    %v1119 = vadd.f32 %v1035, %v1076
    %v1120 = vadd.f32 %v1036, %v1096
    %v1121 = vadd.f32 %v1037, %v1116
    %v1122 = vxor.u32 %v1118, 2147483648
    %v1123 = vmul.f32 %v1122, 1.442695
    %v1124 = vpow.pop %v1123
    %v1125 = vadd.f32 %v1124, 1.0
    %v1126 = vrcp.pop %v1125
    %v1127 = vmul.f32 %v1125, %v1126
    %v1128 = vsub.f32 1.0, %v1127
    %v1129 = vmul.f32 %v1126, %v1128
    %v1130 = vadd.f32 %v1126, %v1129
    %vm1131 = vweird.f32 %v1125
    %vm1132 = vweird.f32 %v1126
    %vm1133 = vmor %vm1131, %vm1132
    %v1134 = vsel %vm1133, %v1126, %v1130
    %v1135 = vand.u32 2147483647, %v1125
    %vm1136 = vcmp.eq.f32.partialorder %v1135, 8.507059e+37
    %v1137 = vand.u32 %v1125, 2147483648
    %v1138 = vor.u32 1.1754944e-38, %v1137
    %v1139 = vsel %vm1136, %v1138, %v1134
    %v1140 = vmul.f32 1.0, %v1139
    %v1141 = vxor.u32 %v1119, 2147483648
    %v1142 = vmul.f32 %v1141, 1.442695
    %v1143 = vpow.pop %v1142
    %v1144 = vadd.f32 %v1143, 1.0
    %v1145 = vrcp.pop %v1144
    %v1146 = vmul.f32 %v1144, %v1145
    %v1147 = vsub.f32 1.0, %v1146
    %v1148 = vmul.f32 %v1145, %v1147
    %v1149 = vadd.f32 %v1145, %v1148
    %vm1150 = vweird.f32 %v1144
    %vm1151 = vweird.f32 %v1145
    %vm1152 = vmor %vm1150, %vm1151
    %v1153 = vsel %vm1152, %v1145, %v1149
    %v1154 = vand.u32 2147483647, %v1144
    %vm1155 = vcmp.eq.f32.partialorder %v1154, 8.507059e+37
    %v1156 = vand.u32 %v1144, 2147483648
    %v1157 = vor.u32 1.1754944e-38, %v1156
    %v1158 = vsel %vm1155, %v1157, %v1153
    %v1159 = vmul.f32 1.0, %v1158
    %v1160 = vtanh.pop %v1120
    %v1161 = vxor.u32 %v1121, 2147483648
    %v1162 = vmul.f32 %v1161, 1.442695
    %v1163 = vpow.pop %v1162
    %v1164 = vadd.f32 %v1163, 1.0
    %v1165 = vrcp.pop %v1164
    %v1166 = vmul.f32 %v1164, %v1165
    %v1167 = vsub.f32 1.0, %v1166
    %v1168 = vmul.f32 %v1165, %v1167
    %v1169 = vadd.f32 %v1165, %v1168
    %vm1170 = vweird.f32 %v1164
    %vm1171 = vweird.f32 %v1165
    %vm1172 = vmor %vm1170, %vm1171
    %v1173 = vsel %vm1172, %v1165, %v1169
    %v1174 = vand.u32 2147483647, %v1164
    %vm1175 = vcmp.eq.f32.partialorder %v1174, 8.507059e+37
    %v1176 = vand.u32 %v1164, 2147483648
    %v1177 = vor.u32 1.1754944e-38, %v1176
    %v1178 = vsel %vm1175, %v1177, %v1173
    %v1179 = vmul.f32 1.0, %v1178
    %v1180 = vmul.f32 %v1140, %v1028
    %v1181 = vmul.f32 %v1159, %v1160
    %v1182 = vadd.f32 %v1180, %v1181
    %v1183 = vtanh.pop %v1182
    %v1184 = vmul.f32 %v1179, %v1183
    %s1185 = scalar_lea.vmem [#allocation7], 48
    %1186 = vst [vmem:[%s1185] sm:$0xff] %v1184
    %s1187 = scalar_lea.vmem [#allocation2], 224
    %v1188 = vld [vmem:[%s1187] sm:$0xff]
    %v1189 = vld [vmem:[%s1187 + $0x8] sm:$0xff]
    %v1190 = vld [vmem:[%s1187 + $0x10] sm:$0xff]
    %v1191 = vld [vmem:[%s1187 + $0x18] sm:$0xff]
    %1192 = vmatpush.msra.mxu0 %v107
    %1193 = vmatpush.msra.mxu0 %v103
    %1194 = vmatpush.msra.mxu0 %v99
    %1195 = vmatpush.msra.mxu0 %v95
    %1196 = vmatpush.msra.mxu0 %v91
    %1197 = vmatpush.msra.mxu0 %v87
    %1198 = vmatpush.msra.mxu0 %v83
    %1199 = vmatpush.msra.mxu0 %v79
    %1200 = vmatpush.msra.mxu0 %v75
    %1201 = vmatpush.msra.mxu0 %v71
    %1202 = vmatpush.msra.mxu0 %v67
    %1203 = vmatpush.msra.mxu0 %v63
    %1204 = vmatpush.msra.mxu0 %v59
    %1205 = vmatpush.msra.mxu0 %v55
    %1206 = vmatpush.msra.mxu0 %v51
    %1207 = vmatpush.msra.mxu0 %v47
    %1208 = vmatmul.f32.gmra.mxu0 %v1184
    %v1209 = vpop.f32.mrf.mxu0
    %v1210 = vadd.f32 0.0, %v1209
    %1211 = vdwg.mxu0
    %1212 = vmatpush.msra.mxu0 %v108
    %1213 = vmatpush.msra.mxu0 %v104
    %1214 = vmatpush.msra.mxu0 %v100
    %1215 = vmatpush.msra.mxu0 %v96
    %1216 = vmatpush.msra.mxu0 %v92
    %1217 = vmatpush.msra.mxu0 %v88
    %1218 = vmatpush.msra.mxu0 %v84
    %1219 = vmatpush.msra.mxu0 %v80
    %1220 = vmatpush.msra.mxu0 %v76
    %1221 = vmatpush.msra.mxu0 %v72
    %1222 = vmatpush.msra.mxu0 %v68
    %1223 = vmatpush.msra.mxu0 %v64
    %1224 = vmatpush.msra.mxu0 %v60
    %1225 = vmatpush.msra.mxu0 %v56
    %1226 = vmatpush.msra.mxu0 %v52
    %1227 = vmatpush.msra.mxu0 %v48
    %1228 = vmatmul.f32.gmra.mxu0 %v1184
    %v1229 = vpop.f32.mrf.mxu0
    %v1230 = vadd.f32 0.0, %v1229
    %1231 = vdwg.mxu0
    %1232 = vmatpush.msra.mxu0 %v109
    %1233 = vmatpush.msra.mxu0 %v105
    %1234 = vmatpush.msra.mxu0 %v101
    %1235 = vmatpush.msra.mxu0 %v97
    %1236 = vmatpush.msra.mxu0 %v93
    %1237 = vmatpush.msra.mxu0 %v89
    %1238 = vmatpush.msra.mxu0 %v85
    %1239 = vmatpush.msra.mxu0 %v81
    %1240 = vmatpush.msra.mxu0 %v77
    %1241 = vmatpush.msra.mxu0 %v73
    %1242 = vmatpush.msra.mxu0 %v69
    %1243 = vmatpush.msra.mxu0 %v65
    %1244 = vmatpush.msra.mxu0 %v61
    %1245 = vmatpush.msra.mxu0 %v57
    %1246 = vmatpush.msra.mxu0 %v53
    %1247 = vmatpush.msra.mxu0 %v49
    %1248 = vmatmul.f32.gmra.mxu0 %v1184
    %v1249 = vpop.f32.mrf.mxu0
    %v1250 = vadd.f32 0.0, %v1249
    %1251 = vdwg.mxu0
    %1252 = vmatpush.msra.mxu0 %v110
    %1253 = vmatpush.msra.mxu0 %v106
    %1254 = vmatpush.msra.mxu0 %v102
    %1255 = vmatpush.msra.mxu0 %v98
    %1256 = vmatpush.msra.mxu0 %v94
    %1257 = vmatpush.msra.mxu0 %v90
    %1258 = vmatpush.msra.mxu0 %v86
    %1259 = vmatpush.msra.mxu0 %v82
    %1260 = vmatpush.msra.mxu0 %v78
    %1261 = vmatpush.msra.mxu0 %v74
    %1262 = vmatpush.msra.mxu0 %v70
    %1263 = vmatpush.msra.mxu0 %v66
    %1264 = vmatpush.msra.mxu0 %v62
    %1265 = vmatpush.msra.mxu0 %v58
    %1266 = vmatpush.msra.mxu0 %v54
    %1267 = vmatpush.msra.mxu0 %v50
    %1268 = vmatmul.f32.gmra.mxu0 %v1184
    %v1269 = vpop.f32.mrf.mxu0
    %v1270 = vadd.f32 0.0, %v1269
    %1271 = vdwg.mxu0
    %v1272 = vadd.f32 %v1188, %v1210
    %v1273 = vadd.f32 %v1189, %v1230
    %v1274 = vadd.f32 %v1190, %v1250
    %v1275 = vadd.f32 %v1191, %v1270
    %v1276 = vxor.u32 %v1272, 2147483648
    %v1277 = vmul.f32 %v1276, 1.442695
    %v1278 = vpow.pop %v1277
    %v1279 = vadd.f32 %v1278, 1.0
    %v1280 = vrcp.pop %v1279
    %v1281 = vmul.f32 %v1279, %v1280
    %v1282 = vsub.f32 1.0, %v1281
    %v1283 = vmul.f32 %v1280, %v1282
    %v1284 = vadd.f32 %v1280, %v1283
    %vm1285 = vweird.f32 %v1279
    %vm1286 = vweird.f32 %v1280
    %vm1287 = vmor %vm1285, %vm1286
    %v1288 = vsel %vm1287, %v1280, %v1284
    %v1289 = vand.u32 2147483647, %v1279
    %vm1290 = vcmp.eq.f32.partialorder %v1289, 8.507059e+37
    %v1291 = vand.u32 %v1279, 2147483648
    %v1292 = vor.u32 1.1754944e-38, %v1291
    %v1293 = vsel %vm1290, %v1292, %v1288
    %v1294 = vmul.f32 1.0, %v1293
    %v1295 = vxor.u32 %v1273, 2147483648
    %v1296 = vmul.f32 %v1295, 1.442695
    %v1297 = vpow.pop %v1296
    %v1298 = vadd.f32 %v1297, 1.0
    %v1299 = vrcp.pop %v1298
    %v1300 = vmul.f32 %v1298, %v1299
    %v1301 = vsub.f32 1.0, %v1300
    %v1302 = vmul.f32 %v1299, %v1301
    %v1303 = vadd.f32 %v1299, %v1302
    %vm1304 = vweird.f32 %v1298
    %vm1305 = vweird.f32 %v1299
    %vm1306 = vmor %vm1304, %vm1305
    %v1307 = vsel %vm1306, %v1299, %v1303
    %v1308 = vand.u32 2147483647, %v1298
    %vm1309 = vcmp.eq.f32.partialorder %v1308, 8.507059e+37
    %v1310 = vand.u32 %v1298, 2147483648
    %v1311 = vor.u32 1.1754944e-38, %v1310
    %v1312 = vsel %vm1309, %v1311, %v1307
    %v1313 = vmul.f32 1.0, %v1312
    %v1314 = vtanh.pop %v1274
    %v1315 = vxor.u32 %v1275, 2147483648
    %v1316 = vmul.f32 %v1315, 1.442695
    %v1317 = vpow.pop %v1316
    %v1318 = vadd.f32 %v1317, 1.0
    %v1319 = vrcp.pop %v1318
    %v1320 = vmul.f32 %v1318, %v1319
    %v1321 = vsub.f32 1.0, %v1320
    %v1322 = vmul.f32 %v1319, %v1321
    %v1323 = vadd.f32 %v1319, %v1322
    %vm1324 = vweird.f32 %v1318
    %vm1325 = vweird.f32 %v1319
    %vm1326 = vmor %vm1324, %vm1325
    %v1327 = vsel %vm1326, %v1319, %v1323
    %v1328 = vand.u32 2147483647, %v1318
    %vm1329 = vcmp.eq.f32.partialorder %v1328, 8.507059e+37
    %v1330 = vand.u32 %v1318, 2147483648
    %v1331 = vor.u32 1.1754944e-38, %v1330
    %v1332 = vsel %vm1329, %v1331, %v1327
    %v1333 = vmul.f32 1.0, %v1332
    %v1334 = vmul.f32 %v1294, %v1182
    %v1335 = vmul.f32 %v1313, %v1314
    %v1336 = vadd.f32 %v1334, %v1335
    %v1337 = vtanh.pop %v1336
    %v1338 = vmul.f32 %v1333, %v1337
    %s1339 = scalar_lea.vmem [#allocation7], 56
    %1340 = vst [vmem:[%s1339] sm:$0xff] %v1338
    %1341 = vst [vmem:[#allocation8] sm:$0xff] %v1336
    // Predicated region
    $region18: #{tpu_custom_call.1} parent=1 // pred_check
      _
    $region19: #{tpu_custom_call.1} parent=1 // pred_check_branch
      %1343 = sbr.rel (0) target = $region21
    $region20: #{tpu_custom_call.1} parent=1 // pred_region
      %1345 = vsyncadd [#allocation4], 0
      %s1346 = sshll.u32 [#allocation7], 4
      %s1347 = int_to_ptr.vmem [resolvable:$true] %s1346
      %s1348 = sshll.u32 %s2, 4
      %s1349 = int_to_ptr.hbm [resolvable:$true] %s1348
      %1354 = dma.vmem_to_hbm [thread:$0]  %s1347, 1024, %s1349, [#allocation4], 128, 128, 8
    $region21: #{tpu_custom_call.1} parent=1 // pred_fallthru
      _
    // Predicated region
    $region22: #{tpu_custom_call.1} parent=1 // pred_check
      _
    $region23: #{tpu_custom_call.1} parent=1 // pred_check_branch
      %1356 = sbr.rel (0) target = $region25
    $region24: #{tpu_custom_call.1} parent=1 // pred_region
      %1358 = vsyncadd [#allocation9], 0
      %s1360 = sshll.u32 [#allocation8], 4
      %s1361 = int_to_ptr.vmem [resolvable:$true] %s1360
      %s1362 = sshll.u32 %s3, 4
      %s1363 = int_to_ptr.hbm [resolvable:$true] %s1362
      %1365 = dma.vmem_to_hbm [thread:$0]  %s1361, 128, %s1363, [#allocation9]
    $region25: #{tpu_custom_call.1} parent=1 // pred_fallthru
      _
    // Predicated region
    $region26: #{tpu_custom_call.1} parent=1 // pred_check
      _
    $region27: #{tpu_custom_call.1} parent=1 // pred_check_branch
      %1367 = sbr.rel (0) target = $region29
    $region28: #{tpu_custom_call.1} parent=1 // pred_region
      %1369 = dma.done [#allocation4], 1024
    $region29: #{tpu_custom_call.1} parent=1 // pred_fallthru
      _
    // Predicated region
    $region30: #{tpu_custom_call.1} parent=1 // pred_check
      _
    $region31: #{tpu_custom_call.1} parent=1 // pred_check_branch
      %1371 = sbr.rel (0) target = $region33
    $region32: #{tpu_custom_call.1} parent=1 // pred_region
      %1373 = dma.done [#allocation9], 128
    $region33: #{tpu_custom_call.1} parent=1 // pred_fallthru
      _
    %1374 = vsyncpa [#allocation3], 1
    %1375 = vsyncpa [#allocation6], 1
    %1376 = vsyncpa [#allocation4], 1
    %1377 = vsyncpa [#allocation9], 1

</llo_original>
